<compile_context>
chip_gen: v6e
topology: v6e:2x2x1
jax: 0.10.0
libtpu: 0.0.40
codegen_flags: <defaults>
</compile_context>

<pallas_src>
import jax
import jax.numpy as jnp
from jax.experimental import pallas as pl
from jax.experimental.pallas import tpu as pltpu

MORGAN_DIM = 2048
MACCS_DIM = 334
EMBED_DIM = 1024
HID1 = 128
HID2 = 64
MACCS_PAD = 384                                   # 334 padded up to a multiple of 128
PAD_IN = MORGAN_DIM + MACCS_PAD + EMBED_DIM       # 3456 (27 * 128)
RAW_IN = MORGAN_DIM + MACCS_DIM + EMBED_DIM       # 3406
OUT_W = 128                                       # packed lane-dense output width
MAX_TILE_B = 512


def _round_up(n, m):
    return (n + m - 1) // m * m


def fpn_kernel(x_ref,
               wm1_ref, wa1_ref, we1_ref,
               wm2g_ref, wa2g_ref, we2g_ref,
               sp_ref,
               out_ref):
    """One batch tile: (TILE_B, 3456) bf16 activations x VMEM-resident bf16 weights."""
    # 128-aligned static column slices of the padded bf16 input tile.
    xm = x_ref[:, :MORGAN_DIM]
    xa = x_ref[:, MORGAN_DIM:MORGAN_DIM + MACCS_PAD]
    xe = x_ref[:, MORGAN_DIM + MACCS_PAD:]

    def branch(xi, w1_ref, b1, w2g_ref):
        # fc1 -> dropout(p=0.1, identity at inference) -> ReLU -> (fc2 ∘ merge_fc1 slice)
        h = jnp.dot(xi, w1_ref[...], preferred_element_type=jnp.float32) + b1
        h = jnp.maximum(h, 0.0)
        return jnp.dot(h.astype(jnp.bfloat16), w2g_ref[...],
                       preferred_element_type=jnp.float32)

    # merge_fc1(cat([fc2_m, fc2_a, fc2_e])) expressed with the folded weights
    # (mathematically identical; no in-kernel lane concatenation needed).
    merge = (branch(xm, wm1_ref, sp_ref[0:1, :], wm2g_ref)
             + branch(xa, wa1_ref, sp_ref[1:2, :], wa2g_ref)
             + branch(xe, we1_ref, sp_ref[2:3, :], we2g_ref)
             + sp_ref[3:4, :HID2])
    # NOTE: the reference forward never applies merge_act_func (no ReLU here),
    # and merge_dropout is identity at inference.

    # merge_fc2 (64 -> 1) as a VPU multiply + cross-lane reduction (no N=1 MXU pass).
    wg2 = sp_ref[4:5, :HID2]             # (1, 64) weight row
    bg2 = sp_ref[4:5, HID2:HID2 + 1]     # (1, 1) bias (= -input_bias after init_parameter)
    out = jnp.sum(merge * wg2, axis=-1, keepdims=True) + bg2
    sig = jax.nn.sigmoid(out)

    # Pack everything into one lane-dense (TILE_B, 128) tile:
    #   lanes [0:64) = merge, [64:96) = out (broadcast), [96:128) = sigmoid(out) (broadcast)
    tb = merge.shape[0]
    out_ref[:, :HID2] = merge
    out_ref[:, HID2:HID2 + 32] = jnp.broadcast_to(out, (tb, 32))
    out_ref[:, HID2 + 32:] = jnp.broadcast_to(sig, (tb, 32))


def make_params(key, input_bias=0.0):
    """PyTorch-style nn.Linear init; returns (kernel-layout params, raw f32 params)."""
    ks = jax.random.split(key, 16)

    def lin(kw, kb, fan_in, fan_out):
        bound = 1.0 / jnp.sqrt(float(fan_in))
        w = jax.random.uniform(kw, (fan_in, fan_out), jnp.float32, -bound, bound)
        b = jax.random.uniform(kb, (fan_out,), jnp.float32, -bound, bound)
        return w, b

    wm1, bm1 = lin(ks[0], ks[1], MORGAN_DIM, HID1)
    wm2, bm2 = lin(ks[2], ks[3], HID1, HID2)
    wa1, ba1 = lin(ks[4], ks[5], MACCS_DIM, HID1)
    wa2, ba2 = lin(ks[6], ks[7], HID1, HID2)
    we1, be1 = lin(ks[8], ks[9], EMBED_DIM, HID1)
    we2, be2 = lin(ks[10], ks[11], HID1, HID2)
    wg1, bg1 = lin(ks[12], ks[13], 3 * HID2, HID2)
    wg2, _ = lin(ks[14], ks[15], HID2, 1)
    # init_parameter(): merge_fc2.bias = -input_bias (constant, frozen)
    bg2 = jnp.float32(-input_bias)

    # zero-pad maccs_fc1 weight rows 334 -> 384 (pairs with the zero-padded input cols)
    wa1_p = jnp.zeros((MACCS_PAD, HID1), jnp.float32).at[:MACCS_DIM].set(wa1)

    # Fold fc2 into merge_fc1 (linear ∘ linear, no nonlinearity between them).
    g1m, g1a, g1e = wg1[:HID2], wg1[HID2:2 * HID2], wg1[2 * HID2:]
    wm2g = wm2 @ g1m
    wa2g = wa2 @ g1a
    we2g = we2 @ g1e
    b_fold = bm2 @ g1m + ba2 @ g1a + be2 @ g1e + bg1

    bf = lambda w: w.astype(jnp.bfloat16)
    # TODO(synk): further byte reduction — int8 fc1 weights on v5e/v6e, fp8 on v7x.

    # All small parameters packed into a single (8, 128) f32 array (one DMA).
    sp = jnp.zeros((8, HID1), jnp.float32)
    sp = sp.at[0, :].set(bm1)
    sp = sp.at[1, :].set(ba1)
    sp = sp.at[2, :].set(be1)
    sp = sp.at[3, :HID2].set(b_fold)
    sp = sp.at[4, :HID2].set(wg2[:, 0])
    sp = sp.at[4, HID2].set(bg2)

    kernel_params = dict(
        wm1=bf(wm1), wa1=bf(wa1_p), we1=bf(we1),
        wm2g=bf(wm2g), wa2g=bf(wa2g), we2g=bf(we2g),
        sp=sp,
    )
    raw_params = dict(wm1=wm1, bm1=bm1, wm2=wm2, bm2=bm2,
                      wa1=wa1, ba1=ba1, wa2=wa2, ba2=ba2,
                      we1=we1, be1=be1, we2=we2, be2=be2,
                      wg1=wg1, bg1=bg1, wg2=wg2, bg2=bg2,
                      wm2g=wm2g, wa2g=wa2g, we2g=we2g, b_fold=b_fold)
    return kernel_params, raw_params


def pad_input(x):
    """[morgan(2048) | maccs(334) | embed(1024)] -> 128-aligned bf16 (B, 3456) layout.

    TODO(synk): in a production pipeline emit this layout at the producer so the
    activation tensor is not re-read/re-written in HBM on every call.
    """
    B = x.shape[0]
    xm = x[:, :MORGAN_DIM]
    xa = x[:, MORGAN_DIM:MORGAN_DIM + MACCS_DIM]
    xe = x[:, MORGAN_DIM + MACCS_DIM:]
    pad = jnp.zeros((B, MACCS_PAD - MACCS_DIM), x.dtype)
    return jnp.concatenate([xm, xa, pad, xe], axis=1).astype(jnp.bfloat16)


def fpn_forward(x, kp, tile_b=MAX_TILE_B):
    B = x.shape[0]
    xp = pad_input(x)

    # keep the batch tile a multiple of 16 (bf16 sublane packing)
    tb = min(tile_b, _round_up(B, 16))
    b_pad = _round_up(B, tb)
    if b_pad != B:
        xp = jnp.pad(xp, ((0, b_pad - B), (0, 0)))
    grid = (b_pad // tb,)

    weights = [kp['wm1'], kp['wa1'], kp['we1'],
               kp['wm2g'], kp['wa2g'], kp['we2g']]
    # Constant index_map -> weights stay VMEM-resident across batch tiles.
    resident = lambda w: pl.BlockSpec(w.shape, lambda i: (0, 0))

    flops_per_row = 2 * (PAD_IN * HID1 + 3 * HID1 * HID2 + HID2)
    weight_bytes = sum(int(w.size) * w.dtype.itemsize for w in weights) \
        + int(kp['sp'].size) * 4
    cost = pl.CostEstimate(
        flops=int(flops_per_row * b_pad),
        transcendentals=int(b_pad),
        bytes_accessed=int(weight_bytes + 2 * b_pad * PAD_IN + 4 * b_pad * OUT_W))

    y = pl.pallas_call(
        fpn_kernel,
        out_shape=jax.ShapeDtypeStruct((b_pad, OUT_W), jnp.float32),
        grid=grid,
        in_specs=[pl.BlockSpec((tb, PAD_IN), lambda i: (i, 0))]
                 + [resident(w) for w in weights]
                 + [pl.BlockSpec(kp['sp'].shape, lambda i: (0, 0))],
        out_specs=pl.BlockSpec((tb, OUT_W), lambda i: (i, 0)),
        compiler_params=pltpu.CompilerParams(
            dimension_semantics=("parallel",),
            vmem_limit_bytes=32 * 1024 * 1024),
        cost_estimate=cost,
    )(xp, *weights, kp['sp'])

    merge = y[:B, :HID2]
    out = y[:B, HID2]
    sig = y[:B, HID2 + 32]
    return out, sig, merge


def fpn_reference_f32(x, raw):
    """Full-f32 pure-JAX reference of the PyTorch forward (eval-mode dropout)."""
    xm = x[:, :MORGAN_DIM]
    xa = x[:, MORGAN_DIM:MORGAN_DIM + MACCS_DIM]
    xe = x[:, MORGAN_DIM + MACCS_DIM:]

    def branch(xi, w1, b1, w2, b2):
        h = jnp.maximum(xi @ w1 + b1, 0.0)
        return h @ w2 + b2

    m = branch(xm, raw['wm1'], raw['bm1'], raw['wm2'], raw['bm2'])
    a = branch(xa, raw['wa1'], raw['ba1'], raw['wa2'], raw['ba2'])
    e = branch(xe, raw['we1'], raw['be1'], raw['we2'], raw['be2'])
    cat = jnp.concatenate([m, a, e], axis=1)
    merge = cat @ raw['wg1'] + raw['bg1']
    out = (merge @ raw['wg2'])[:, 0] + raw['bg2']
    return out, jax.nn.sigmoid(out), merge


def fpn_reference_bf16(x, kp):
    """Pure-JAX reference mirroring the kernel's bf16 rounding and weight folding."""
    up = lambda w: w.astype(jnp.float32)
    q = lambda v: v.astype(jnp.bfloat16).astype(jnp.float32)
    sp = kp['sp']

    xm = q(x[:, :MORGAN_DIM])
    xa = q(x[:, MORGAN_DIM:MORGAN_DIM + MACCS_DIM])
    xe = q(x[:, MORGAN_DIM + MACCS_DIM:])

    def branch(xi, w1, b1, w2g):
        h = jnp.maximum(xi @ up(w1)[:xi.shape[1]] + b1, 0.0)
        return q(h) @ up(w2g)

    merge = (branch(xm, kp['wm1'], sp[0, :], kp['wm2g'])
             + branch(xa, kp['wa1'], sp[1, :], kp['wa2g'])
             + branch(xe, kp['we1'], sp[2, :], kp['we2g'])
             + sp[3, :HID2])
    out = jnp.sum(merge * sp[4, :HID2][None, :], axis=-1) + sp[4, HID2]
    return out, jax.nn.sigmoid(out), merge


if __name__ == "__main__":
    key = jax.random.PRNGKey(0)
    kx, kparam_key = jax.random.split(key)

    B = 8
    x = jax.random.normal(kx, (B, RAW_IN), jnp.float32)
    kparams, raw = make_params(kparam_key, input_bias=0.0)

    out, sig, merge = fpn_forward(x, kparams)
    jax.block_until_ready((out, sig, merge))
    assert out.shape == (B,) and sig.shape == (B,) and merge.shape == (B, HID2)

    # Tight check vs a reference that mirrors the kernel's bf16 quantization/folding.
    q_out, q_sig, q_merge = fpn_reference_bf16(x, kparams)
    assert jnp.allclose(out, q_out, atol=1e-3, rtol=1e-3)
    assert jnp.allclose(sig, q_sig, atol=1e-3, rtol=1e-3)
    assert jnp.allclose(merge, q_merge, atol=1e-3, rtol=1e-3)

    # Loose check vs the full-f32 PyTorch-equivalent forward
    # (bf16 weight/activation storage introduces ~1e-3-level deviations).
    f_out, f_sig, f_merge = fpn_reference_f32(x, raw)
    assert jnp.allclose(out, f_out, atol=5e-2, rtol=5e-2)
    assert jnp.allclose(sig, f_sig, atol=5e-2, rtol=5e-2)
    assert jnp.allclose(merge, f_merge, atol=5e-2, rtol=5e-2)

    print("KERNEL_OK")
</pallas_src>

<mosaic_0001>
module attributes {stable_mosaic.version = 11 : i64} {
  func.func @fpn_kernel(%arg0: i32, %arg1: memref<16x3456xbf16, #tpu.memory_space<vmem>>, %arg2: memref<2048x128xbf16, #tpu.memory_space<vmem>>, %arg3: memref<384x128xbf16, #tpu.memory_space<vmem>>, %arg4: memref<1024x128xbf16, #tpu.memory_space<vmem>>, %arg5: memref<128x64xbf16, #tpu.memory_space<vmem>>, %arg6: memref<128x64xbf16, #tpu.memory_space<vmem>>, %arg7: memref<128x64xbf16, #tpu.memory_space<vmem>>, %arg8: memref<8x128xf32, #tpu.memory_space<vmem>>, %arg9: memref<16x128xf32, #tpu.memory_space<vmem>>) attributes {dimension_semantics = [#tpu.dimension_semantics<parallel>], iteration_bounds = array<i64: 1>, scalar_prefetch = 0 : i64, scratch_operands = 0 : i64, tpu.core_type = #tpu.core_type<tc>, window_params = [{transform_indices = @transform_0, window_bounds = array<i64: 16, 3456>}, {pipeline_mode = #tpu.pipeline_mode<synchronous>, transform_indices = @transform_1, window_bounds = array<i64: 2048, 128>}, {pipeline_mode = #tpu.pipeline_mode<synchronous>, transform_indices = @transform_2, window_bounds = array<i64: 384, 128>}, {pipeline_mode = #tpu.pipeline_mode<synchronous>, transform_indices = @transform_3, window_bounds = array<i64: 1024, 128>}, {pipeline_mode = #tpu.pipeline_mode<synchronous>, transform_indices = @transform_4, window_bounds = array<i64: 128, 64>}, {pipeline_mode = #tpu.pipeline_mode<synchronous>, transform_indices = @transform_5, window_bounds = array<i64: 128, 64>}, {pipeline_mode = #tpu.pipeline_mode<synchronous>, transform_indices = @transform_6, window_bounds = array<i64: 128, 64>}, {pipeline_mode = #tpu.pipeline_mode<synchronous>, transform_indices = @transform_7, window_bounds = array<i64: 8, 128>}, {transform_indices = @transform_8, window_bounds = array<i64: 16, 128>}]} {
    %c0 = arith.constant 0 : index
    %c0_0 = arith.constant 0 : index
    %0 = vector.load %arg1[%c0, %c0_0] : memref<16x3456xbf16, #tpu.memory_space<vmem>>, vector<16x2048xbf16>
    %c0_1 = arith.constant 0 : index
    %c2048 = arith.constant 2048 : index
    %1 = vector.load %arg1[%c0_1, %c2048] : memref<16x3456xbf16, #tpu.memory_space<vmem>>, vector<16x384xbf16>
    %c0_2 = arith.constant 0 : index
    %c2432 = arith.constant 2432 : index
    %2 = vector.load %arg1[%c0_2, %c2432] : memref<16x3456xbf16, #tpu.memory_space<vmem>>, vector<16x1024xbf16>
    %c0_3 = arith.constant 0 : index
    %c0_4 = arith.constant 0 : index
    %3 = vector.load %arg8[%c0_3, %c0_4] : memref<8x128xf32, #tpu.memory_space<vmem>>, vector<1x128xf32>
    %c0_5 = arith.constant 0 : index
    %c0_6 = arith.constant 0 : index
    %4 = vector.load %arg2[%c0_5, %c0_6] : memref<2048x128xbf16, #tpu.memory_space<vmem>>, vector<2048x128xbf16>
    %cst = arith.constant dense<0.000000e+00> : vector<16x128xf32>
    %5 = tpu.matmul %0, %4, %cst {dimension_numbers = #tpu.dot_dimension_numbers<[1], [0], [0], [1], [0, 0, 1, 1], [], []>} : vector<16x2048xbf16>, vector<2048x128xbf16>, vector<16x128xf32> -> vector<16x128xf32>
    %6 = vector.broadcast %3 : vector<1x128xf32> to vector<16x128xf32>
    %7 = arith.addf %5, %6 : vector<16x128xf32>
    %cst_7 = arith.constant 0.000000e+00 : f32
    %8 = vector.broadcast %cst_7 : f32 to vector<16x128xf32>
    %9 = arith.maximumf %7, %8 : vector<16x128xf32>
    %10 = arith.truncf %9 : vector<16x128xf32> to vector<16x128xbf16>
    %c0_8 = arith.constant 0 : index
    %c0_9 = arith.constant 0 : index
    %11 = vector.load %arg5[%c0_8, %c0_9] : memref<128x64xbf16, #tpu.memory_space<vmem>>, vector<128x64xbf16>
    %cst_10 = arith.constant dense<0.000000e+00> : vector<16x64xf32>
    %12 = tpu.matmul %10, %11, %cst_10 {dimension_numbers = #tpu.dot_dimension_numbers<[1], [0], [0], [1], [0, 0, 1, 1], [], []>} : vector<16x128xbf16>, vector<128x64xbf16>, vector<16x64xf32> -> vector<16x64xf32>
    %c1 = arith.constant 1 : index
    %c0_11 = arith.constant 0 : index
    %13 = vector.load %arg8[%c1, %c0_11] : memref<8x128xf32, #tpu.memory_space<vmem>>, vector<1x128xf32>
    %c0_12 = arith.constant 0 : index
    %c0_13 = arith.constant 0 : index
    %14 = vector.load %arg3[%c0_12, %c0_13] : memref<384x128xbf16, #tpu.memory_space<vmem>>, vector<384x128xbf16>
    %cst_14 = arith.constant dense<0.000000e+00> : vector<16x128xf32>
    %15 = tpu.matmul %1, %14, %cst_14 {dimension_numbers = #tpu.dot_dimension_numbers<[1], [0], [0], [1], [0, 0, 1, 1], [], []>} : vector<16x384xbf16>, vector<384x128xbf16>, vector<16x128xf32> -> vector<16x128xf32>
    %16 = vector.broadcast %13 : vector<1x128xf32> to vector<16x128xf32>
    %17 = arith.addf %15, %16 : vector<16x128xf32>
    %cst_15 = arith.constant 0.000000e+00 : f32
    %18 = vector.broadcast %cst_15 : f32 to vector<16x128xf32>
    %19 = arith.maximumf %17, %18 : vector<16x128xf32>
    %20 = arith.truncf %19 : vector<16x128xf32> to vector<16x128xbf16>
    %c0_16 = arith.constant 0 : index
    %c0_17 = arith.constant 0 : index
    %21 = vector.load %arg6[%c0_16, %c0_17] : memref<128x64xbf16, #tpu.memory_space<vmem>>, vector<128x64xbf16>
    %cst_18 = arith.constant dense<0.000000e+00> : vector<16x64xf32>
    %22 = tpu.matmul %20, %21, %cst_18 {dimension_numbers = #tpu.dot_dimension_numbers<[1], [0], [0], [1], [0, 0, 1, 1], [], []>} : vector<16x128xbf16>, vector<128x64xbf16>, vector<16x64xf32> -> vector<16x64xf32>
    %23 = arith.addf %12, %22 : vector<16x64xf32>
    %c2 = arith.constant 2 : index
    %c0_19 = arith.constant 0 : index
    %24 = vector.load %arg8[%c2, %c0_19] : memref<8x128xf32, #tpu.memory_space<vmem>>, vector<1x128xf32>
    %c0_20 = arith.constant 0 : index
    %c0_21 = arith.constant 0 : index
    %25 = vector.load %arg4[%c0_20, %c0_21] : memref<1024x128xbf16, #tpu.memory_space<vmem>>, vector<1024x128xbf16>
    %cst_22 = arith.constant dense<0.000000e+00> : vector<16x128xf32>
    %26 = tpu.matmul %2, %25, %cst_22 {dimension_numbers = #tpu.dot_dimension_numbers<[1], [0], [0], [1], [0, 0, 1, 1], [], []>} : vector<16x1024xbf16>, vector<1024x128xbf16>, vector<16x128xf32> -> vector<16x128xf32>
    %27 = vector.broadcast %24 : vector<1x128xf32> to vector<16x128xf32>
    %28 = arith.addf %26, %27 : vector<16x128xf32>
    %cst_23 = arith.constant 0.000000e+00 : f32
    %29 = vector.broadcast %cst_23 : f32 to vector<16x128xf32>
    %30 = arith.maximumf %28, %29 : vector<16x128xf32>
    %31 = arith.truncf %30 : vector<16x128xf32> to vector<16x128xbf16>
    %c0_24 = arith.constant 0 : index
    %c0_25 = arith.constant 0 : index
    %32 = vector.load %arg7[%c0_24, %c0_25] : memref<128x64xbf16, #tpu.memory_space<vmem>>, vector<128x64xbf16>
    %cst_26 = arith.constant dense<0.000000e+00> : vector<16x64xf32>
    %33 = tpu.matmul %31, %32, %cst_26 {dimension_numbers = #tpu.dot_dimension_numbers<[1], [0], [0], [1], [0, 0, 1, 1], [], []>} : vector<16x128xbf16>, vector<128x64xbf16>, vector<16x64xf32> -> vector<16x64xf32>
    %34 = arith.addf %23, %33 : vector<16x64xf32>
    %c3 = arith.constant 3 : index
    %c0_27 = arith.constant 0 : index
    %35 = vector.load %arg8[%c3, %c0_27] : memref<8x128xf32, #tpu.memory_space<vmem>>, vector<1x64xf32>
    %36 = vector.broadcast %35 : vector<1x64xf32> to vector<16x64xf32>
    %37 = arith.addf %34, %36 : vector<16x64xf32>
    %c4 = arith.constant 4 : index
    %c0_28 = arith.constant 0 : index
    %38 = vector.load %arg8[%c4, %c0_28] : memref<8x128xf32, #tpu.memory_space<vmem>>, vector<1x64xf32>
    %c4_29 = arith.constant 4 : index
    %c64 = arith.constant 64 : index
    %39 = vector.load %arg8[%c4_29, %c64] : memref<8x128xf32, #tpu.memory_space<vmem>>, vector<1x1xf32>
    %40 = vector.broadcast %38 : vector<1x64xf32> to vector<16x64xf32>
    %41 = arith.mulf %37, %40 : vector<16x64xf32>
    %cst_30 = arith.constant dense<0.000000e+00> : vector<16xf32>
    %42 = vector.multi_reduction <add>, %41, %cst_30 [1] : vector<16x64xf32> to vector<16xf32>
    %43 = vector.shape_cast %42 : vector<16xf32> to vector<16x1xf32>
    %44 = vector.broadcast %39 : vector<1x1xf32> to vector<16x1xf32>
    %45 = arith.addf %43, %44 : vector<16x1xf32>
    %46 = arith.negf %45 : vector<16x1xf32>
    %47 = math.exp %46 : vector<16x1xf32>
    %cst_31 = arith.constant 1.000000e+00 : f32
    %48 = vector.broadcast %cst_31 : f32 to vector<16x1xf32>
    %49 = arith.addf %48, %47 : vector<16x1xf32>
    %50 = arith.divf %48, %49 : vector<16x1xf32>
    %c0_32 = arith.constant 0 : index
    %c0_33 = arith.constant 0 : index
    %51 = vector.load %arg9[%c0_32, %c0_33] : memref<16x128xf32, #tpu.memory_space<vmem>>, vector<16x64xf32>
    tpu.vector_store %arg9[%c0_32, %c0_33], %37 {strides = array<i32>} : memref<16x128xf32, #tpu.memory_space<vmem>>, vector<16x64xf32>,
    %52 = vector.shape_cast %45 : vector<16x1xf32> to vector<16x1xf32>
    %53 = vector.broadcast %52 : vector<16x1xf32> to vector<16x32xf32>
    %c0_34 = arith.constant 0 : index
    %c64_35 = arith.constant 64 : index
    %54 = vector.load %arg9[%c0_34, %c64_35] : memref<16x128xf32, #tpu.memory_space<vmem>>, vector<16x32xf32>
    tpu.vector_store %arg9[%c0_34, %c64_35], %53 {strides = array<i32>} : memref<16x128xf32, #tpu.memory_space<vmem>>, vector<16x32xf32>,
    %55 = vector.shape_cast %50 : vector<16x1xf32> to vector<16x1xf32>
    %56 = vector.broadcast %55 : vector<16x1xf32> to vector<16x32xf32>
    %c0_36 = arith.constant 0 : index
    %c96 = arith.constant 96 : index
    %57 = vector.load %arg9[%c0_36, %c96] : memref<16x128xf32, #tpu.memory_space<vmem>>, vector<16x32xf32>
    tpu.vector_store %arg9[%c0_36, %c96], %56 {strides = array<i32>} : memref<16x128xf32, #tpu.memory_space<vmem>>, vector<16x32xf32>,
    return
  }
  func.func @transform_0(%arg0: i32) -> (i32, i32) {
    %c0_i32 = arith.constant 0 : i32
    %c0_i32_0 = arith.constant 0 : i32
    return %arg0, %c0_i32 : i32, i32
  }
  func.func @transform_1(%arg0: i32) -> (i32, i32) {
    %c0_i32 = arith.constant 0 : i32
    %c0_i32_0 = arith.constant 0 : i32
    %c0_i32_1 = arith.constant 0 : i32
    return %c0_i32, %c0_i32_0 : i32, i32
  }
  func.func @transform_2(%arg0: i32) -> (i32, i32) {
    %c0_i32 = arith.constant 0 : i32
    %c0_i32_0 = arith.constant 0 : i32
    %c0_i32_1 = arith.constant 0 : i32
    return %c0_i32, %c0_i32_0 : i32, i32
  }
  func.func @transform_3(%arg0: i32) -> (i32, i32) {
    %c0_i32 = arith.constant 0 : i32
    %c0_i32_0 = arith.constant 0 : i32
    %c0_i32_1 = arith.constant 0 : i32
    return %c0_i32, %c0_i32_0 : i32, i32
  }
  func.func @transform_4(%arg0: i32) -> (i32, i32) {
    %c0_i32 = arith.constant 0 : i32
    %c0_i32_0 = arith.constant 0 : i32
    %c0_i32_1 = arith.constant 0 : i32
    return %c0_i32, %c0_i32_0 : i32, i32
  }
  func.func @transform_5(%arg0: i32) -> (i32, i32) {
    %c0_i32 = arith.constant 0 : i32
    %c0_i32_0 = arith.constant 0 : i32
    %c0_i32_1 = arith.constant 0 : i32
    return %c0_i32, %c0_i32_0 : i32, i32
  }
  func.func @transform_6(%arg0: i32) -> (i32, i32) {
    %c0_i32 = arith.constant 0 : i32
    %c0_i32_0 = arith.constant 0 : i32
    %c0_i32_1 = arith.constant 0 : i32
    return %c0_i32, %c0_i32_0 : i32, i32
  }
  func.func @transform_7(%arg0: i32) -> (i32, i32) {
    %c0_i32 = arith.constant 0 : i32
    %c0_i32_0 = arith.constant 0 : i32
    %c0_i32_1 = arith.constant 0 : i32
    return %c0_i32, %c0_i32_0 : i32, i32
  }
  func.func @transform_8(%arg0: i32) -> (i32, i32) {
    %c0_i32 = arith.constant 0 : i32
    %c0_i32_0 = arith.constant 0 : i32
    return %arg0, %c0_i32 : i32, i32
  }
}

</mosaic_0001>

<llo_original>
// kernel: tpu_custom_call.1
$region0: #{tpu_custom_call.1}
  #allocation0 [shape = 'u32[]', space=smem, size = 0x4, offset = 0x4, fixed_abs, tag = 'smem constant byte address 0x4 - core index']
  #allocation1 [shape = 'u32[144,128]{1,0:T(1,128)}', space=vmem, size = 0x12000, scoped, tag = 'internal scratch']
  %s0 = inlined_call_operand.vmem [shape: bf16[16,3456], index: 0, kind: input, shape index: {}]
  %s1 = inlined_call_operand.hbm [shape: bf16[2048,128], index: 1, kind: input, shape index: {}]
  %s2 = inlined_call_operand.hbm [shape: bf16[384,128], index: 2, kind: input, shape index: {}]
  %s3 = inlined_call_operand.hbm [shape: bf16[1024,128], index: 3, kind: input, shape index: {}]
  %s4 = inlined_call_operand.vmem [shape: bf16[128,64], index: 4, kind: input, shape index: {}]
  %s5 = inlined_call_operand.vmem [shape: bf16[128,64], index: 5, kind: input, shape index: {}]
  %s6 = inlined_call_operand.vmem [shape: bf16[128,64], index: 6, kind: input, shape index: {}]
  %s7 = inlined_call_operand.vmem [shape: f32[8,128], index: 7, kind: input, shape index: {}]
  %s8 = inlined_call_operand.hbm [shape: f32[16,128], index: 8, kind: output, shape index: {}]
  %s9 = sld [smem:[#allocation0]]
  $region54: #{tpu_custom_call.1} parent=0
    _
  %s11 = ssub.s32 1, %s9
  %s12 = scalar_select 0, %s11, %s9
  $region1: #{tpu_custom_call.1} parent=0
    #allocation2 [shape = 'u8[524288]{0}', space=vmem, size = 0x80000, scoped, tag = 'input window, operand 1, single buffered']
    #allocation3 [shape = 's32[1]{0}', space=sflag, size = 0x4, scoped, tag = 'scoped memory for tpu_custom_call.1']
    #allocation4 [shape = 's32[1]{0}', space=sflag, size = 0x4, scoped, tag = 'scoped memory for tpu_custom_call.1']
    #allocation5 [shape = 'u8[98304]{0}', space=vmem, size = 0x18000, scoped, tag = 'input window, operand 2, single buffered']
    #allocation6 [shape = 's32[1]{0}', space=sflag, size = 0x4, scoped, tag = 'scoped memory for tpu_custom_call.1']
    #allocation7 [shape = 'u8[262144]{0}', space=vmem, size = 0x40000, scoped, tag = 'input window, operand 3, single buffered']
    #allocation8 [shape = 'u8[8192]{0}', space=vmem, size = 0x2000, scoped, tag = 'output window, operand 0, single buffered']
    %13 = vsyncpa [#allocation3], 0
    %14 = vsyncpa [#allocation6], 0
    %15 = vsyncpa [#allocation4], 0
    // Predicated region
    $region2: #{tpu_custom_call.1} parent=1 // pred_check
      _
    $region3: #{tpu_custom_call.1} parent=1 // pred_check_branch
      %17 = sbr.rel (0) target = $region5
    $region4: #{tpu_custom_call.1} parent=1 // pred_region
      _
    $region5: #{tpu_custom_call.1} parent=1 // pred_fallthru
      _
    // Predicated region
    $region6: #{tpu_custom_call.1} parent=1 // pred_check
      _
    $region7: #{tpu_custom_call.1} parent=1 // pred_check_branch
      %19 = sbr.rel (0) target = $region9
    $region8: #{tpu_custom_call.1} parent=1 // pred_region
      %s21 = ssub.s32 16384, 16384
      %22 = vsyncadd [#allocation3], %s21
      %s23 = sshll.u32 [#allocation2], 4
      %s24 = int_to_ptr.vmem [resolvable:$true] %s23
      %29 = dma.hbm_to_vmem [thread:$0]  %s1, 16384, %s24, [#allocation3], 64, 64, 4
    $region9: #{tpu_custom_call.1} parent=1 // pred_fallthru
      _
    // Predicated region
    $region10: #{tpu_custom_call.1} parent=1 // pred_check
      _
    $region11: #{tpu_custom_call.1} parent=1 // pred_check_branch
      %31 = sbr.rel (0) target = $region13
    $region12: #{tpu_custom_call.1} parent=1 // pred_region
      %s33 = ssub.s32 3072, 3072
      %34 = vsyncadd [#allocation6], %s33
      %s35 = sshll.u32 [#allocation5], 4
      %s36 = int_to_ptr.vmem [resolvable:$true] %s35
      %41 = dma.hbm_to_vmem [thread:$0]  %s2, 3072, %s36, [#allocation6], 64, 64, 4
    $region13: #{tpu_custom_call.1} parent=1 // pred_fallthru
      _
    // Predicated region
    $region14: #{tpu_custom_call.1} parent=1 // pred_check
      _
    $region15: #{tpu_custom_call.1} parent=1 // pred_check_branch
      %43 = sbr.rel (0) target = $region17
    $region16: #{tpu_custom_call.1} parent=1 // pred_region
      %s45 = ssub.s32 8192, 8192
      %46 = vsyncadd [#allocation6], %s45
      %s47 = sshll.u32 [#allocation7], 4
      %s48 = int_to_ptr.vmem [resolvable:$true] %s47
      %53 = dma.hbm_to_vmem [thread:$0]  %s3, 8192, %s48, [#allocation6], 64, 64, 4
    $region17: #{tpu_custom_call.1} parent=1 // pred_fallthru
      _
    // Predicated region
    $region18: #{tpu_custom_call.1} parent=1 // pred_check
      _
    $region19: #{tpu_custom_call.1} parent=1 // pred_check_branch
      %55 = sbr.rel (0) target = $region21
    $region20: #{tpu_custom_call.1} parent=1 // pred_region
      _
    $region21: #{tpu_custom_call.1} parent=1 // pred_fallthru
      _
    // Predicated region
    $region22: #{tpu_custom_call.1} parent=1 // pred_check
      _
    $region23: #{tpu_custom_call.1} parent=1 // pred_check_branch
      %57 = sbr.rel (0) target = $region25
    $region24: #{tpu_custom_call.1} parent=1 // pred_region
      _
    $region25: #{tpu_custom_call.1} parent=1 // pred_fallthru
      _
    // Predicated region
    $region26: #{tpu_custom_call.1} parent=1 // pred_check
      _
    $region27: #{tpu_custom_call.1} parent=1 // pred_check_branch
      %59 = sbr.rel (0) target = $region29
    $region28: #{tpu_custom_call.1} parent=1 // pred_region
      _
    $region29: #{tpu_custom_call.1} parent=1 // pred_fallthru
      _
    // Predicated region
    $region30: #{tpu_custom_call.1} parent=1 // pred_check
      _
    $region31: #{tpu_custom_call.1} parent=1 // pred_check_branch
      %61 = sbr.rel (0) target = $region33
    $region32: #{tpu_custom_call.1} parent=1 // pred_region
      _
    $region33: #{tpu_custom_call.1} parent=1 // pred_fallthru
      _
    // Predicated region
    $region34: #{tpu_custom_call.1} parent=1 // pred_check
      _
    $region35: #{tpu_custom_call.1} parent=1 // pred_check_branch
      %63 = sbr.rel (0) target = $region37
    $region36: #{tpu_custom_call.1} parent=1 // pred_region
      %64 = dma.done [#allocation3], 16384
    $region37: #{tpu_custom_call.1} parent=1 // pred_fallthru
      _
    // Predicated region
    $region38: #{tpu_custom_call.1} parent=1 // pred_check
      _
    $region39: #{tpu_custom_call.1} parent=1 // pred_check_branch
      %66 = sbr.rel (0) target = $region41
    $region40: #{tpu_custom_call.1} parent=1 // pred_region
      %67 = dma.done [#allocation6], 3072
    $region41: #{tpu_custom_call.1} parent=1 // pred_fallthru
      _
    // Predicated region
    $region42: #{tpu_custom_call.1} parent=1 // pred_check
      _
    $region43: #{tpu_custom_call.1} parent=1 // pred_check_branch
      %69 = sbr.rel (0) target = $region45
    $region44: #{tpu_custom_call.1} parent=1 // pred_region
      %70 = dma.done [#allocation6], 8192
    $region45: #{tpu_custom_call.1} parent=1 // pred_fallthru
      _
    %v72 = vld [vmem:[%s0] sm:$0xff]
    %v73 = vld [vmem:[%s0 + $0x8] sm:$0xff]
    %v74 = vld [vmem:[%s0 + $0x10] sm:$0xff]
    %v75 = vld [vmem:[%s0 + $0x18] sm:$0xff]
    %v76 = vld [vmem:[%s0 + $0x20] sm:$0xff]
    %v77 = vld [vmem:[%s0 + $0x28] sm:$0xff]
    %v78 = vld [vmem:[%s0 + $0x30] sm:$0xff]
    %v79 = vld [vmem:[%s0 + $0x38] sm:$0xff]
    %v80 = vld [vmem:[%s0 + $0x6c] sm:$0xff]
    %v81 = vld [vmem:[%s0 + $0x74] sm:$0xff]
    %v82 = vld [vmem:[%s0 + $0x7c] sm:$0xff]
    %v83 = vld [vmem:[%s0 + $0x84] sm:$0xff]
    %v84 = vld [vmem:[%s0 + $0x8c] sm:$0xff]
    %v85 = vld [vmem:[%s0 + $0x94] sm:$0xff]
    %v86 = vld [vmem:[%s0 + $0x9c] sm:$0xff]
    %v87 = vld [vmem:[%s0 + $0xa4] sm:$0xff]
    %v88 = vld [vmem:[%s0 + $0x40] sm:$0xff]
    %v89 = vld [vmem:[%s0 + $0x48] sm:$0xf]
    %v90 = vld [vmem:[%s0 + $0xac] sm:$0xff]
    %v91 = vld [vmem:[%s0 + $0xb4] sm:$0xf]
    %v92 = vld [vmem:[%s0 + $0x4c] sm:$0xff]
    %v93 = vld [vmem:[%s0 + $0x54] sm:$0xff]
    %v94 = vld [vmem:[%s0 + $0x5c] sm:$0xff]
    %v95 = vld [vmem:[%s0 + $0x64] sm:$0xff]
    %v96 = vld [vmem:[%s0 + $0xb8] sm:$0xff]
    %v97 = vld [vmem:[%s0 + $0xc0] sm:$0xff]
    %v98 = vld [vmem:[%s0 + $0xc8] sm:$0xff]
    %v99 = vld [vmem:[%s0 + $0xd0] sm:$0xff]
    %v100 = vld [vmem:[%s7] sm:$0x1]
    %v101 = vld [vmem:[#allocation2] sm:$0xf]
    %v102 = vld [vmem:[#allocation2 + $0x4] sm:$0xf]
    %v103 = vld [vmem:[#allocation2 + $0x8] sm:$0xf]
    %v104 = vld [vmem:[#allocation2 + $0xc] sm:$0xf]
    %v105 = vld [vmem:[#allocation2 + $0x10] sm:$0xf]
    %v106 = vld [vmem:[#allocation2 + $0x14] sm:$0xf]
    %v107 = vld [vmem:[#allocation2 + $0x18] sm:$0xf]
    %v108 = vld [vmem:[#allocation2 + $0x1c] sm:$0xf]
    %v109 = vld [vmem:[#allocation2 + $0x20] sm:$0xf]
    %v110 = vld [vmem:[#allocation2 + $0x24] sm:$0xf]
    %v111 = vld [vmem:[#allocation2 + $0x28] sm:$0xf]
    %v112 = vld [vmem:[#allocation2 + $0x2c] sm:$0xf]
    %v113 = vld [vmem:[#allocation2 + $0x30] sm:$0xf]
    %v114 = vld [vmem:[#allocation2 + $0x34] sm:$0xf]
    %v115 = vld [vmem:[#allocation2 + $0x38] sm:$0xf]
    %v116 = vld [vmem:[#allocation2 + $0x3c] sm:$0xf]
    %v117 = vld [vmem:[#allocation2 + $0x40] sm:$0xf]
    %v118 = vld [vmem:[#allocation2 + $0x44] sm:$0xf]
    %v119 = vld [vmem:[#allocation2 + $0x48] sm:$0xf]
    %v120 = vld [vmem:[#allocation2 + $0x4c] sm:$0xf]
    %v121 = vld [vmem:[#allocation2 + $0x50] sm:$0xf]
    %v122 = vld [vmem:[#allocation2 + $0x54] sm:$0xf]
    %v123 = vld [vmem:[#allocation2 + $0x58] sm:$0xf]
    %v124 = vld [vmem:[#allocation2 + $0x5c] sm:$0xf]
    %v125 = vld [vmem:[#allocation2 + $0x60] sm:$0xf]
    %v126 = vld [vmem:[#allocation2 + $0x64] sm:$0xf]
    %v127 = vld [vmem:[#allocation2 + $0x68] sm:$0xf]
    %v128 = vld [vmem:[#allocation2 + $0x6c] sm:$0xf]
    %v129 = vld [vmem:[#allocation2 + $0x70] sm:$0xf]
    %v130 = vld [vmem:[#allocation2 + $0x74] sm:$0xf]
    %v131 = vld [vmem:[#allocation2 + $0x78] sm:$0xf]
    %v132 = vld [vmem:[#allocation2 + $0x7c] sm:$0xf]
    %v133 = vld [vmem:[#allocation2 + $0x80] sm:$0xf]
    %v134 = vld [vmem:[#allocation2 + $0x84] sm:$0xf]
    %v135 = vld [vmem:[#allocation2 + $0x88] sm:$0xf]
    %v136 = vld [vmem:[#allocation2 + $0x8c] sm:$0xf]
    %v137 = vld [vmem:[#allocation2 + $0x90] sm:$0xf]
    %v138 = vld [vmem:[#allocation2 + $0x94] sm:$0xf]
    %v139 = vld [vmem:[#allocation2 + $0x98] sm:$0xf]
    %v140 = vld [vmem:[#allocation2 + $0x9c] sm:$0xf]
    %v141 = vld [vmem:[#allocation2 + $0xa0] sm:$0xf]
    %v142 = vld [vmem:[#allocation2 + $0xa4] sm:$0xf]
    %v143 = vld [vmem:[#allocation2 + $0xa8] sm:$0xf]
    %v144 = vld [vmem:[#allocation2 + $0xac] sm:$0xf]
    %v145 = vld [vmem:[#allocation2 + $0xb0] sm:$0xf]
    %v146 = vld [vmem:[#allocation2 + $0xb4] sm:$0xf]
    %v147 = vld [vmem:[#allocation2 + $0xb8] sm:$0xf]
    %v148 = vld [vmem:[#allocation2 + $0xbc] sm:$0xf]
    %v149 = vld [vmem:[#allocation2 + $0xc0] sm:$0xf]
    %v150 = vld [vmem:[#allocation2 + $0xc4] sm:$0xf]
    %v151 = vld [vmem:[#allocation2 + $0xc8] sm:$0xf]
    %v152 = vld [vmem:[#allocation2 + $0xcc] sm:$0xf]
    %v153 = vld [vmem:[#allocation2 + $0xd0] sm:$0xf]
    %v154 = vld [vmem:[#allocation2 + $0xd4] sm:$0xf]
    %v155 = vld [vmem:[#allocation2 + $0xd8] sm:$0xf]
    %v156 = vld [vmem:[#allocation2 + $0xdc] sm:$0xf]
    %v157 = vld [vmem:[#allocation2 + $0xe0] sm:$0xf]
    %v158 = vld [vmem:[#allocation2 + $0xe4] sm:$0xf]
    %v159 = vld [vmem:[#allocation2 + $0xe8] sm:$0xf]
    %v160 = vld [vmem:[#allocation2 + $0xec] sm:$0xf]
    %v161 = vld [vmem:[#allocation2 + $0xf0] sm:$0xf]
    %v162 = vld [vmem:[#allocation2 + $0xf4] sm:$0xf]
    %v163 = vld [vmem:[#allocation2 + $0xf8] sm:$0xf]
    %v164 = vld [vmem:[#allocation2 + $0xfc] sm:$0xf]
    %v165 = vld [vmem:[#allocation2 + $0x100] sm:$0xf]
    %v166 = vld [vmem:[#allocation2 + $0x104] sm:$0xf]
    %v167 = vld [vmem:[#allocation2 + $0x108] sm:$0xf]
    %v168 = vld [vmem:[#allocation2 + $0x10c] sm:$0xf]
    %v169 = vld [vmem:[#allocation2 + $0x110] sm:$0xf]
    %v170 = vld [vmem:[#allocation2 + $0x114] sm:$0xf]
    %v171 = vld [vmem:[#allocation2 + $0x118] sm:$0xf]
    %v172 = vld [vmem:[#allocation2 + $0x11c] sm:$0xf]
    %v173 = vld [vmem:[#allocation2 + $0x120] sm:$0xf]
    %v174 = vld [vmem:[#allocation2 + $0x124] sm:$0xf]
    %v175 = vld [vmem:[#allocation2 + $0x128] sm:$0xf]
    %v176 = vld [vmem:[#allocation2 + $0x12c] sm:$0xf]
    %v177 = vld [vmem:[#allocation2 + $0x130] sm:$0xf]
    %v178 = vld [vmem:[#allocation2 + $0x134] sm:$0xf]
    %v179 = vld [vmem:[#allocation2 + $0x138] sm:$0xf]
    %v180 = vld [vmem:[#allocation2 + $0x13c] sm:$0xf]
    %v181 = vld [vmem:[#allocation2 + $0x140] sm:$0xf]
    %v182 = vld [vmem:[#allocation2 + $0x144] sm:$0xf]
    %v183 = vld [vmem:[#allocation2 + $0x148] sm:$0xf]
    %v184 = vld [vmem:[#allocation2 + $0x14c] sm:$0xf]
    %v185 = vld [vmem:[#allocation2 + $0x150] sm:$0xf]
    %v186 = vld [vmem:[#allocation2 + $0x154] sm:$0xf]
    %v187 = vld [vmem:[#allocation2 + $0x158] sm:$0xf]
    %v188 = vld [vmem:[#allocation2 + $0x15c] sm:$0xf]
    %v189 = vld [vmem:[#allocation2 + $0x160] sm:$0xf]
    %v190 = vld [vmem:[#allocation2 + $0x164] sm:$0xf]
    %v191 = vld [vmem:[#allocation2 + $0x168] sm:$0xf]
    %v192 = vld [vmem:[#allocation2 + $0x16c] sm:$0xf]
    %v193 = vld [vmem:[#allocation2 + $0x170] sm:$0xf]
    %v194 = vld [vmem:[#allocation2 + $0x174] sm:$0xf]
    %v195 = vld [vmem:[#allocation2 + $0x178] sm:$0xf]
    %v196 = vld [vmem:[#allocation2 + $0x17c] sm:$0xf]
    %v197 = vld [vmem:[#allocation2 + $0x180] sm:$0xf]
    %v198 = vld [vmem:[#allocation2 + $0x184] sm:$0xf]
    %v199 = vld [vmem:[#allocation2 + $0x188] sm:$0xf]
    %v200 = vld [vmem:[#allocation2 + $0x18c] sm:$0xf]
    %v201 = vld [vmem:[#allocation2 + $0x190] sm:$0xf]
    %v202 = vld [vmem:[#allocation2 + $0x194] sm:$0xf]
    %v203 = vld [vmem:[#allocation2 + $0x198] sm:$0xf]
    %v204 = vld [vmem:[#allocation2 + $0x19c] sm:$0xf]
    %v205 = vld [vmem:[#allocation2 + $0x1a0] sm:$0xf]
    %v206 = vld [vmem:[#allocation2 + $0x1a4] sm:$0xf]
    %v207 = vld [vmem:[#allocation2 + $0x1a8] sm:$0xf]
    %v208 = vld [vmem:[#allocation2 + $0x1ac] sm:$0xf]
    %v209 = vld [vmem:[#allocation2 + $0x1b0] sm:$0xf]
    %v210 = vld [vmem:[#allocation2 + $0x1b4] sm:$0xf]
    %v211 = vld [vmem:[#allocation2 + $0x1b8] sm:$0xf]
    %v212 = vld [vmem:[#allocation2 + $0x1bc] sm:$0xf]
    %v213 = vld [vmem:[#allocation2 + $0x1c0] sm:$0xf]
    %v214 = vld [vmem:[#allocation2 + $0x1c4] sm:$0xf]
    %v215 = vld [vmem:[#allocation2 + $0x1c8] sm:$0xf]
    %v216 = vld [vmem:[#allocation2 + $0x1cc] sm:$0xf]
    %v217 = vld [vmem:[#allocation2 + $0x1d0] sm:$0xf]
    %v218 = vld [vmem:[#allocation2 + $0x1d4] sm:$0xf]
    %v219 = vld [vmem:[#allocation2 + $0x1d8] sm:$0xf]
    %v220 = vld [vmem:[#allocation2 + $0x1dc] sm:$0xf]
    %v221 = vld [vmem:[#allocation2 + $0x1e0] sm:$0xf]
    %v222 = vld [vmem:[#allocation2 + $0x1e4] sm:$0xf]
    %v223 = vld [vmem:[#allocation2 + $0x1e8] sm:$0xf]
    %v224 = vld [vmem:[#allocation2 + $0x1ec] sm:$0xf]
    %v225 = vld [vmem:[#allocation2 + $0x1f0] sm:$0xf]
    %v226 = vld [vmem:[#allocation2 + $0x1f4] sm:$0xf]
    %v227 = vld [vmem:[#allocation2 + $0x1f8] sm:$0xf]
    %v228 = vld [vmem:[#allocation2 + $0x1fc] sm:$0xf]
    %v229 = vld [vmem:[#allocation2 + $0x200] sm:$0xf]
    %v230 = vld [vmem:[#allocation2 + $0x204] sm:$0xf]
    %v231 = vld [vmem:[#allocation2 + $0x208] sm:$0xf]
    %v232 = vld [vmem:[#allocation2 + $0x20c] sm:$0xf]
    %v233 = vld [vmem:[#allocation2 + $0x210] sm:$0xf]
    %v234 = vld [vmem:[#allocation2 + $0x214] sm:$0xf]
    %v235 = vld [vmem:[#allocation2 + $0x218] sm:$0xf]
    %v236 = vld [vmem:[#allocation2 + $0x21c] sm:$0xf]
    %v237 = vld [vmem:[#allocation2 + $0x220] sm:$0xf]
    %v238 = vld [vmem:[#allocation2 + $0x224] sm:$0xf]
    %v239 = vld [vmem:[#allocation2 + $0x228] sm:$0xf]
    %v240 = vld [vmem:[#allocation2 + $0x22c] sm:$0xf]
    %v241 = vld [vmem:[#allocation2 + $0x230] sm:$0xf]
    %v242 = vld [vmem:[#allocation2 + $0x234] sm:$0xf]
    %v243 = vld [vmem:[#allocation2 + $0x238] sm:$0xf]
    %v244 = vld [vmem:[#allocation2 + $0x23c] sm:$0xf]
    %v245 = vld [vmem:[#allocation2 + $0x240] sm:$0xf]
    %v246 = vld [vmem:[#allocation2 + $0x244] sm:$0xf]
    %v247 = vld [vmem:[#allocation2 + $0x248] sm:$0xf]
    %v248 = vld [vmem:[#allocation2 + $0x24c] sm:$0xf]
    %v249 = vld [vmem:[#allocation2 + $0x250] sm:$0xf]
    %v250 = vld [vmem:[#allocation2 + $0x254] sm:$0xf]
    %v251 = vld [vmem:[#allocation2 + $0x258] sm:$0xf]
    %v252 = vld [vmem:[#allocation2 + $0x25c] sm:$0xf]
    %v253 = vld [vmem:[#allocation2 + $0x260] sm:$0xf]
    %v254 = vld [vmem:[#allocation2 + $0x264] sm:$0xf]
    %v255 = vld [vmem:[#allocation2 + $0x268] sm:$0xf]
    %v256 = vld [vmem:[#allocation2 + $0x26c] sm:$0xf]
    %v257 = vld [vmem:[#allocation2 + $0x270] sm:$0xf]
    %v258 = vld [vmem:[#allocation2 + $0x274] sm:$0xf]
    %v259 = vld [vmem:[#allocation2 + $0x278] sm:$0xf]
    %v260 = vld [vmem:[#allocation2 + $0x27c] sm:$0xf]
    %v261 = vld [vmem:[#allocation2 + $0x280] sm:$0xf]
    %v262 = vld [vmem:[#allocation2 + $0x284] sm:$0xf]
    %v263 = vld [vmem:[#allocation2 + $0x288] sm:$0xf]
    %v264 = vld [vmem:[#allocation2 + $0x28c] sm:$0xf]
    %v265 = vld [vmem:[#allocation2 + $0x290] sm:$0xf]
    %v266 = vld [vmem:[#allocation2 + $0x294] sm:$0xf]
    %v267 = vld [vmem:[#allocation2 + $0x298] sm:$0xf]
    %v268 = vld [vmem:[#allocation2 + $0x29c] sm:$0xf]
    %v269 = vld [vmem:[#allocation2 + $0x2a0] sm:$0xf]
    %v270 = vld [vmem:[#allocation2 + $0x2a4] sm:$0xf]
    %v271 = vld [vmem:[#allocation2 + $0x2a8] sm:$0xf]
    %v272 = vld [vmem:[#allocation2 + $0x2ac] sm:$0xf]
    %v273 = vld [vmem:[#allocation2 + $0x2b0] sm:$0xf]
    %v274 = vld [vmem:[#allocation2 + $0x2b4] sm:$0xf]
    %v275 = vld [vmem:[#allocation2 + $0x2b8] sm:$0xf]
    %v276 = vld [vmem:[#allocation2 + $0x2bc] sm:$0xf]
    %v277 = vld [vmem:[#allocation2 + $0x2c0] sm:$0xf]
    %v278 = vld [vmem:[#allocation2 + $0x2c4] sm:$0xf]
    %v279 = vld [vmem:[#allocation2 + $0x2c8] sm:$0xf]
    %v280 = vld [vmem:[#allocation2 + $0x2cc] sm:$0xf]
    %v281 = vld [vmem:[#allocation2 + $0x2d0] sm:$0xf]
    %v282 = vld [vmem:[#allocation2 + $0x2d4] sm:$0xf]
    %v283 = vld [vmem:[#allocation2 + $0x2d8] sm:$0xf]
    %v284 = vld [vmem:[#allocation2 + $0x2dc] sm:$0xf]
    %v285 = vld [vmem:[#allocation2 + $0x2e0] sm:$0xf]
    %v286 = vld [vmem:[#allocation2 + $0x2e4] sm:$0xf]
    %v287 = vld [vmem:[#allocation2 + $0x2e8] sm:$0xf]
    %v288 = vld [vmem:[#allocation2 + $0x2ec] sm:$0xf]
    %v289 = vld [vmem:[#allocation2 + $0x2f0] sm:$0xf]
    %v290 = vld [vmem:[#allocation2 + $0x2f4] sm:$0xf]
    %v291 = vld [vmem:[#allocation2 + $0x2f8] sm:$0xf]
    %v292 = vld [vmem:[#allocation2 + $0x2fc] sm:$0xf]
    %v293 = vld [vmem:[#allocation2 + $0x300] sm:$0xf]
    %v294 = vld [vmem:[#allocation2 + $0x304] sm:$0xf]
    %v295 = vld [vmem:[#allocation2 + $0x308] sm:$0xf]
    %v296 = vld [vmem:[#allocation2 + $0x30c] sm:$0xf]
    %v297 = vld [vmem:[#allocation2 + $0x310] sm:$0xf]
    %v298 = vld [vmem:[#allocation2 + $0x314] sm:$0xf]
    %v299 = vld [vmem:[#allocation2 + $0x318] sm:$0xf]
    %v300 = vld [vmem:[#allocation2 + $0x31c] sm:$0xf]
    %v301 = vld [vmem:[#allocation2 + $0x320] sm:$0xf]
    %v302 = vld [vmem:[#allocation2 + $0x324] sm:$0xf]
    %v303 = vld [vmem:[#allocation2 + $0x328] sm:$0xf]
    %v304 = vld [vmem:[#allocation2 + $0x32c] sm:$0xf]
    %v305 = vld [vmem:[#allocation2 + $0x330] sm:$0xf]
    %v306 = vld [vmem:[#allocation2 + $0x334] sm:$0xf]
    %v307 = vld [vmem:[#allocation2 + $0x338] sm:$0xf]
    %v308 = vld [vmem:[#allocation2 + $0x33c] sm:$0xf]
    %v309 = vld [vmem:[#allocation2 + $0x340] sm:$0xf]
    %v310 = vld [vmem:[#allocation2 + $0x344] sm:$0xf]
    %v311 = vld [vmem:[#allocation2 + $0x348] sm:$0xf]
    %v312 = vld [vmem:[#allocation2 + $0x34c] sm:$0xf]
    %v313 = vld [vmem:[#allocation2 + $0x350] sm:$0xf]
    %v314 = vld [vmem:[#allocation2 + $0x354] sm:$0xf]
    %v315 = vld [vmem:[#allocation2 + $0x358] sm:$0xf]
    %v316 = vld [vmem:[#allocation2 + $0x35c] sm:$0xf]
    %v317 = vld [vmem:[#allocation2 + $0x360] sm:$0xf]
    %v318 = vld [vmem:[#allocation2 + $0x364] sm:$0xf]
    %v319 = vld [vmem:[#allocation2 + $0x368] sm:$0xf]
    %v320 = vld [vmem:[#allocation2 + $0x36c] sm:$0xf]
    %v321 = vld [vmem:[#allocation2 + $0x370] sm:$0xf]
    %v322 = vld [vmem:[#allocation2 + $0x374] sm:$0xf]
    %v323 = vld [vmem:[#allocation2 + $0x378] sm:$0xf]
    %v324 = vld [vmem:[#allocation2 + $0x37c] sm:$0xf]
    %v325 = vld [vmem:[#allocation2 + $0x380] sm:$0xf]
    %v326 = vld [vmem:[#allocation2 + $0x384] sm:$0xf]
    %v327 = vld [vmem:[#allocation2 + $0x388] sm:$0xf]
    %v328 = vld [vmem:[#allocation2 + $0x38c] sm:$0xf]
    %v329 = vld [vmem:[#allocation2 + $0x390] sm:$0xf]
    %v330 = vld [vmem:[#allocation2 + $0x394] sm:$0xf]
    %v331 = vld [vmem:[#allocation2 + $0x398] sm:$0xf]
    %v332 = vld [vmem:[#allocation2 + $0x39c] sm:$0xf]
    %v333 = vld [vmem:[#allocation2 + $0x3a0] sm:$0xf]
    %v334 = vld [vmem:[#allocation2 + $0x3a4] sm:$0xf]
    %v335 = vld [vmem:[#allocation2 + $0x3a8] sm:$0xf]
    %v336 = vld [vmem:[#allocation2 + $0x3ac] sm:$0xf]
    %v337 = vld [vmem:[#allocation2 + $0x3b0] sm:$0xf]
    %v338 = vld [vmem:[#allocation2 + $0x3b4] sm:$0xf]
    %v339 = vld [vmem:[#allocation2 + $0x3b8] sm:$0xf]
    %v340 = vld [vmem:[#allocation2 + $0x3bc] sm:$0xf]
    %v341 = vld [vmem:[#allocation2 + $0x3c0] sm:$0xf]
    %v342 = vld [vmem:[#allocation2 + $0x3c4] sm:$0xf]
    %v343 = vld [vmem:[#allocation2 + $0x3c8] sm:$0xf]
    %v344 = vld [vmem:[#allocation2 + $0x3cc] sm:$0xf]
    %v345 = vld [vmem:[#allocation2 + $0x3d0] sm:$0xf]
    %v346 = vld [vmem:[#allocation2 + $0x3d4] sm:$0xf]
    %v347 = vld [vmem:[#allocation2 + $0x3d8] sm:$0xf]
    %v348 = vld [vmem:[#allocation2 + $0x3dc] sm:$0xf]
    %v349 = vld [vmem:[#allocation2 + $0x3e0] sm:$0xf]
    %v350 = vld [vmem:[#allocation2 + $0x3e4] sm:$0xf]
    %v351 = vld [vmem:[#allocation2 + $0x3e8] sm:$0xf]
    %v352 = vld [vmem:[#allocation2 + $0x3ec] sm:$0xf]
    %v353 = vld [vmem:[#allocation2 + $0x3f0] sm:$0xf]
    %v354 = vld [vmem:[#allocation2 + $0x3f4] sm:$0xf]
    %v355 = vld [vmem:[#allocation2 + $0x3f8] sm:$0xf]
    %v356 = vld [vmem:[#allocation2 + $0x3fc] sm:$0xf]
    %v357 = vlaneseq
    %v358 = vshrl.u32 %v357, 7
    %v359 = vsub.s32 0, %v358
    %v360 = vrot.slane %v100, %v359
    %v377 = vunpack.c.l.b16 %v72
    %v378 = vunpack.c.h.b16 %v72
    %v379 = vunpack.c.l.b16 %v73
    %v380 = vunpack.c.h.b16 %v73
    %v381 = vunpack.c.l.b16 %v74
    %v382 = vunpack.c.h.b16 %v74
    %v383 = vunpack.c.l.b16 %v75
    %v384 = vunpack.c.h.b16 %v75
    %v385 = vunpack.c.l.b16 %v76
    %v386 = vunpack.c.h.b16 %v76
    %v387 = vunpack.c.l.b16 %v77
    %v388 = vunpack.c.h.b16 %v77
    %v389 = vunpack.c.l.b16 %v78
    %v390 = vunpack.c.h.b16 %v78
    %v391 = vunpack.c.l.b16 %v79
    %v392 = vunpack.c.h.b16 %v79
    %v393 = vunpack.c.l.b16 %v80
    %v394 = vunpack.c.h.b16 %v80
    %v395 = vunpack.c.l.b16 %v81
    %v396 = vunpack.c.h.b16 %v81
    %v397 = vunpack.c.l.b16 %v82
    %v398 = vunpack.c.h.b16 %v82
    %v399 = vunpack.c.l.b16 %v83
    %v400 = vunpack.c.h.b16 %v83
    %v401 = vunpack.c.l.b16 %v84
    %v402 = vunpack.c.h.b16 %v84
    %v403 = vunpack.c.l.b16 %v85
    %v404 = vunpack.c.h.b16 %v85
    %v405 = vunpack.c.l.b16 %v86
    %v406 = vunpack.c.h.b16 %v86
    %v407 = vunpack.c.l.b16 %v87
    %v408 = vunpack.c.h.b16 %v87
    %v409 = vpack.c.b16 %v393, %v377
    %v410 = vpack.c.b16 %v394, %v378
    %v411 = vpack.c.b16 %v395, %v379
    %v412 = vpack.c.b16 %v396, %v380
    %v413 = vpack.c.b16 %v397, %v381
    %v414 = vpack.c.b16 %v398, %v382
    %v415 = vpack.c.b16 %v399, %v383
    %v416 = vpack.c.b16 %v400, %v384
    %v417 = vpack.c.b16 %v401, %v385
    %v418 = vpack.c.b16 %v402, %v386
    %v419 = vpack.c.b16 %v403, %v387
    %v420 = vpack.c.b16 %v404, %v388
    %v421 = vpack.c.b16 %v405, %v389
    %v422 = vpack.c.b16 %v406, %v390
    %v423 = vpack.c.b16 %v407, %v391
    %v424 = vpack.c.b16 %v408, %v392
    %v697 = vunpack.c.l.b16 %v101
    %v698 = vunpack.c.l.b16 %v102
    %v699 = vunpack.c.l.b16 %v103
    %v700 = vunpack.c.l.b16 %v104
    %v701 = vunpack.c.l.b16 %v105
    %v702 = vunpack.c.l.b16 %v106
    %v703 = vunpack.c.l.b16 %v107
    %v704 = vunpack.c.l.b16 %v108
    %v705 = vunpack.c.l.b16 %v109
    %v706 = vunpack.c.l.b16 %v110
    %v707 = vunpack.c.l.b16 %v111
    %v708 = vunpack.c.l.b16 %v112
    %v709 = vunpack.c.l.b16 %v113
    %v710 = vunpack.c.l.b16 %v114
    %v711 = vunpack.c.l.b16 %v115
    %v712 = vunpack.c.l.b16 %v116
    %v713 = vunpack.c.l.b16 %v117
    %v714 = vunpack.c.l.b16 %v118
    %v715 = vunpack.c.l.b16 %v119
    %v716 = vunpack.c.l.b16 %v120
    %v717 = vunpack.c.l.b16 %v121
    %v718 = vunpack.c.l.b16 %v122
    %v719 = vunpack.c.l.b16 %v123
    %v720 = vunpack.c.l.b16 %v124
    %v721 = vunpack.c.l.b16 %v125
    %v722 = vunpack.c.l.b16 %v126
    %v723 = vunpack.c.l.b16 %v127
    %v724 = vunpack.c.l.b16 %v128
    %v725 = vunpack.c.l.b16 %v129
    %v726 = vunpack.c.l.b16 %v130
    %v727 = vunpack.c.l.b16 %v131
    %v728 = vunpack.c.l.b16 %v132
    %v729 = vunpack.c.l.b16 %v133
    %v730 = vunpack.c.l.b16 %v134
    %v731 = vunpack.c.l.b16 %v135
    %v732 = vunpack.c.l.b16 %v136
    %v733 = vunpack.c.l.b16 %v137
    %v734 = vunpack.c.l.b16 %v138
    %v735 = vunpack.c.l.b16 %v139
    %v736 = vunpack.c.l.b16 %v140
    %v737 = vunpack.c.l.b16 %v141
    %v738 = vunpack.c.l.b16 %v142
    %v739 = vunpack.c.l.b16 %v143
    %v740 = vunpack.c.l.b16 %v144
    %v741 = vunpack.c.l.b16 %v145
    %v742 = vunpack.c.l.b16 %v146
    %v743 = vunpack.c.l.b16 %v147
    %v744 = vunpack.c.l.b16 %v148
    %v745 = vunpack.c.l.b16 %v149
    %v746 = vunpack.c.l.b16 %v150
    %v747 = vunpack.c.l.b16 %v151
    %v748 = vunpack.c.l.b16 %v152
    %v749 = vunpack.c.l.b16 %v153
    %v750 = vunpack.c.l.b16 %v154
    %v751 = vunpack.c.l.b16 %v155
    %v752 = vunpack.c.l.b16 %v156
    %v753 = vunpack.c.l.b16 %v157
    %v754 = vunpack.c.l.b16 %v158
    %v755 = vunpack.c.l.b16 %v159
    %v756 = vunpack.c.l.b16 %v160
    %v757 = vunpack.c.l.b16 %v161
    %v758 = vunpack.c.l.b16 %v162
    %v759 = vunpack.c.l.b16 %v163
    %v760 = vunpack.c.l.b16 %v164
    %v761 = vunpack.c.l.b16 %v165
    %v762 = vunpack.c.l.b16 %v166
    %v763 = vunpack.c.l.b16 %v167
    %v764 = vunpack.c.l.b16 %v168
    %v765 = vunpack.c.l.b16 %v169
    %v766 = vunpack.c.l.b16 %v170
    %v767 = vunpack.c.l.b16 %v171
    %v768 = vunpack.c.l.b16 %v172
    %v769 = vunpack.c.l.b16 %v173
    %v770 = vunpack.c.l.b16 %v174
    %v771 = vunpack.c.l.b16 %v175
    %v772 = vunpack.c.l.b16 %v176
    %v773 = vunpack.c.l.b16 %v177
    %v774 = vunpack.c.l.b16 %v178
    %v775 = vunpack.c.l.b16 %v179
    %v776 = vunpack.c.l.b16 %v180
    %v777 = vunpack.c.l.b16 %v181
    %v778 = vunpack.c.l.b16 %v182
    %v779 = vunpack.c.l.b16 %v183
    %v780 = vunpack.c.l.b16 %v184
    %v781 = vunpack.c.l.b16 %v185
    %v782 = vunpack.c.l.b16 %v186
    %v783 = vunpack.c.l.b16 %v187
    %v784 = vunpack.c.l.b16 %v188
    %v785 = vunpack.c.l.b16 %v189
    %v786 = vunpack.c.l.b16 %v190
    %v787 = vunpack.c.l.b16 %v191
    %v788 = vunpack.c.l.b16 %v192
    %v789 = vunpack.c.l.b16 %v193
    %v790 = vunpack.c.l.b16 %v194
    %v791 = vunpack.c.l.b16 %v195
    %v792 = vunpack.c.l.b16 %v196
    %v793 = vunpack.c.l.b16 %v197
    %v794 = vunpack.c.l.b16 %v198
    %v795 = vunpack.c.l.b16 %v199
    %v796 = vunpack.c.l.b16 %v200
    %v797 = vunpack.c.l.b16 %v201
    %v798 = vunpack.c.l.b16 %v202
    %v799 = vunpack.c.l.b16 %v203
    %v800 = vunpack.c.l.b16 %v204
    %v801 = vunpack.c.l.b16 %v205
    %v802 = vunpack.c.l.b16 %v206
    %v803 = vunpack.c.l.b16 %v207
    %v804 = vunpack.c.l.b16 %v208
    %v805 = vunpack.c.l.b16 %v209
    %v806 = vunpack.c.l.b16 %v210
    %v807 = vunpack.c.l.b16 %v211
    %v808 = vunpack.c.l.b16 %v212
    %v809 = vunpack.c.l.b16 %v213
    %v810 = vunpack.c.l.b16 %v214
    %v811 = vunpack.c.l.b16 %v215
    %v812 = vunpack.c.l.b16 %v216
    %v813 = vunpack.c.l.b16 %v217
    %v814 = vunpack.c.l.b16 %v218
    %v815 = vunpack.c.l.b16 %v219
    %v816 = vunpack.c.l.b16 %v220
    %v817 = vunpack.c.l.b16 %v221
    %v818 = vunpack.c.l.b16 %v222
    %v819 = vunpack.c.l.b16 %v223
    %v820 = vunpack.c.l.b16 %v224
    %v821 = vunpack.c.l.b16 %v225
    %v822 = vunpack.c.l.b16 %v226
    %v823 = vunpack.c.l.b16 %v227
    %v824 = vunpack.c.l.b16 %v228
    %v825 = vunpack.c.l.b16 %v229
    %v826 = vunpack.c.l.b16 %v230
    %v827 = vunpack.c.l.b16 %v231
    %v828 = vunpack.c.l.b16 %v232
    %v829 = vunpack.c.l.b16 %v233
    %v830 = vunpack.c.l.b16 %v234
    %v831 = vunpack.c.l.b16 %v235
    %v832 = vunpack.c.l.b16 %v236
    %v833 = vunpack.c.l.b16 %v237
    %v834 = vunpack.c.l.b16 %v238
    %v835 = vunpack.c.l.b16 %v239
    %v836 = vunpack.c.l.b16 %v240
    %v837 = vunpack.c.l.b16 %v241
    %v838 = vunpack.c.l.b16 %v242
    %v839 = vunpack.c.l.b16 %v243
    %v840 = vunpack.c.l.b16 %v244
    %v841 = vunpack.c.l.b16 %v245
    %v842 = vunpack.c.l.b16 %v246
    %v843 = vunpack.c.l.b16 %v247
    %v844 = vunpack.c.l.b16 %v248
    %v845 = vunpack.c.l.b16 %v249
    %v846 = vunpack.c.l.b16 %v250
    %v847 = vunpack.c.l.b16 %v251
    %v848 = vunpack.c.l.b16 %v252
    %v849 = vunpack.c.l.b16 %v253
    %v850 = vunpack.c.l.b16 %v254
    %v851 = vunpack.c.l.b16 %v255
    %v852 = vunpack.c.l.b16 %v256
    %v853 = vunpack.c.l.b16 %v257
    %v854 = vunpack.c.l.b16 %v258
    %v855 = vunpack.c.l.b16 %v259
    %v856 = vunpack.c.l.b16 %v260
    %v857 = vunpack.c.l.b16 %v261
    %v858 = vunpack.c.l.b16 %v262
    %v859 = vunpack.c.l.b16 %v263
    %v860 = vunpack.c.l.b16 %v264
    %v861 = vunpack.c.l.b16 %v265
    %v862 = vunpack.c.l.b16 %v266
    %v863 = vunpack.c.l.b16 %v267
    %v864 = vunpack.c.l.b16 %v268
    %v865 = vunpack.c.l.b16 %v269
    %v866 = vunpack.c.l.b16 %v270
    %v867 = vunpack.c.l.b16 %v271
    %v868 = vunpack.c.l.b16 %v272
    %v869 = vunpack.c.l.b16 %v273
    %v870 = vunpack.c.l.b16 %v274
    %v871 = vunpack.c.l.b16 %v275
    %v872 = vunpack.c.l.b16 %v276
    %v873 = vunpack.c.l.b16 %v277
    %v874 = vunpack.c.l.b16 %v278
    %v875 = vunpack.c.l.b16 %v279
    %v876 = vunpack.c.l.b16 %v280
    %v877 = vunpack.c.l.b16 %v281
    %v878 = vunpack.c.l.b16 %v282
    %v879 = vunpack.c.l.b16 %v283
    %v880 = vunpack.c.l.b16 %v284
    %v881 = vunpack.c.l.b16 %v285
    %v882 = vunpack.c.l.b16 %v286
    %v883 = vunpack.c.l.b16 %v287
    %v884 = vunpack.c.l.b16 %v288
    %v885 = vunpack.c.l.b16 %v289
    %v886 = vunpack.c.l.b16 %v290
    %v887 = vunpack.c.l.b16 %v291
    %v888 = vunpack.c.l.b16 %v292
    %v889 = vunpack.c.l.b16 %v293
    %v890 = vunpack.c.l.b16 %v294
    %v891 = vunpack.c.l.b16 %v295
    %v892 = vunpack.c.l.b16 %v296
    %v893 = vunpack.c.l.b16 %v297
    %v894 = vunpack.c.l.b16 %v298
    %v895 = vunpack.c.l.b16 %v299
    %v896 = vunpack.c.l.b16 %v300
    %v897 = vunpack.c.l.b16 %v301
    %v898 = vunpack.c.l.b16 %v302
    %v899 = vunpack.c.l.b16 %v303
    %v900 = vunpack.c.l.b16 %v304
    %v901 = vunpack.c.l.b16 %v305
    %v902 = vunpack.c.l.b16 %v306
    %v903 = vunpack.c.l.b16 %v307
    %v904 = vunpack.c.l.b16 %v308
    %v905 = vunpack.c.l.b16 %v309
    %v906 = vunpack.c.l.b16 %v310
    %v907 = vunpack.c.l.b16 %v311
    %v908 = vunpack.c.l.b16 %v312
    %v909 = vunpack.c.l.b16 %v313
    %v910 = vunpack.c.l.b16 %v314
    %v911 = vunpack.c.l.b16 %v315
    %v912 = vunpack.c.l.b16 %v316
    %v913 = vunpack.c.l.b16 %v317
    %v914 = vunpack.c.l.b16 %v318
    %v915 = vunpack.c.l.b16 %v319
    %v916 = vunpack.c.l.b16 %v320
    %v917 = vunpack.c.l.b16 %v321
    %v918 = vunpack.c.l.b16 %v322
    %v919 = vunpack.c.l.b16 %v323
    %v920 = vunpack.c.l.b16 %v324
    %v921 = vunpack.c.l.b16 %v325
    %v922 = vunpack.c.l.b16 %v326
    %v923 = vunpack.c.l.b16 %v327
    %v924 = vunpack.c.l.b16 %v328
    %v925 = vunpack.c.l.b16 %v329
    %v926 = vunpack.c.l.b16 %v330
    %v927 = vunpack.c.l.b16 %v331
    %v928 = vunpack.c.l.b16 %v332
    %v929 = vunpack.c.l.b16 %v333
    %v930 = vunpack.c.l.b16 %v334
    %v931 = vunpack.c.l.b16 %v335
    %v932 = vunpack.c.l.b16 %v336
    %v933 = vunpack.c.l.b16 %v337
    %v934 = vunpack.c.l.b16 %v338
    %v935 = vunpack.c.l.b16 %v339
    %v936 = vunpack.c.l.b16 %v340
    %v937 = vunpack.c.l.b16 %v341
    %v938 = vunpack.c.l.b16 %v342
    %v939 = vunpack.c.l.b16 %v343
    %v940 = vunpack.c.l.b16 %v344
    %v941 = vunpack.c.l.b16 %v345
    %v942 = vunpack.c.l.b16 %v346
    %v943 = vunpack.c.l.b16 %v347
    %v944 = vunpack.c.l.b16 %v348
    %v945 = vunpack.c.l.b16 %v349
    %v946 = vunpack.c.l.b16 %v350
    %v947 = vunpack.c.l.b16 %v351
    %v948 = vunpack.c.l.b16 %v352
    %v949 = vunpack.c.l.b16 %v353
    %v950 = vunpack.c.l.b16 %v354
    %v951 = vunpack.c.l.b16 %v355
    %v952 = vunpack.c.l.b16 %v356
    %v953 = vpack.c.b16 %v698, %v697
    %v954 = vpack.c.b16 %v700, %v699
    %v955 = vpack.c.b16 %v702, %v701
    %v956 = vpack.c.b16 %v704, %v703
    %v957 = vpack.c.b16 %v706, %v705
    %v958 = vpack.c.b16 %v708, %v707
    %v959 = vpack.c.b16 %v710, %v709
    %v960 = vpack.c.b16 %v712, %v711
    %v961 = vpack.c.b16 %v714, %v713
    %v962 = vpack.c.b16 %v716, %v715
    %v963 = vpack.c.b16 %v718, %v717
    %v964 = vpack.c.b16 %v720, %v719
    %v965 = vpack.c.b16 %v722, %v721
    %v966 = vpack.c.b16 %v724, %v723
    %v967 = vpack.c.b16 %v726, %v725
    %v968 = vpack.c.b16 %v728, %v727
    %v969 = vpack.c.b16 %v730, %v729
    %v970 = vpack.c.b16 %v732, %v731
    %v971 = vpack.c.b16 %v734, %v733
    %v972 = vpack.c.b16 %v736, %v735
    %v973 = vpack.c.b16 %v738, %v737
    %v974 = vpack.c.b16 %v740, %v739
    %v975 = vpack.c.b16 %v742, %v741
    %v976 = vpack.c.b16 %v744, %v743
    %v977 = vpack.c.b16 %v746, %v745
    %v978 = vpack.c.b16 %v748, %v747
    %v979 = vpack.c.b16 %v750, %v749
    %v980 = vpack.c.b16 %v752, %v751
    %v981 = vpack.c.b16 %v754, %v753
    %v982 = vpack.c.b16 %v756, %v755
    %v983 = vpack.c.b16 %v758, %v757
    %v984 = vpack.c.b16 %v760, %v759
    %v985 = vpack.c.b16 %v762, %v761
    %v986 = vpack.c.b16 %v764, %v763
    %v987 = vpack.c.b16 %v766, %v765
    %v988 = vpack.c.b16 %v768, %v767
    %v989 = vpack.c.b16 %v770, %v769
    %v990 = vpack.c.b16 %v772, %v771
    %v991 = vpack.c.b16 %v774, %v773
    %v992 = vpack.c.b16 %v776, %v775
    %v993 = vpack.c.b16 %v778, %v777
    %v994 = vpack.c.b16 %v780, %v779
    %v995 = vpack.c.b16 %v782, %v781
    %v996 = vpack.c.b16 %v784, %v783
    %v997 = vpack.c.b16 %v786, %v785
    %v998 = vpack.c.b16 %v788, %v787
    %v999 = vpack.c.b16 %v790, %v789
    %v1000 = vpack.c.b16 %v792, %v791
    %v1001 = vpack.c.b16 %v794, %v793
    %v1002 = vpack.c.b16 %v796, %v795
    %v1003 = vpack.c.b16 %v798, %v797
    %v1004 = vpack.c.b16 %v800, %v799
    %v1005 = vpack.c.b16 %v802, %v801
    %v1006 = vpack.c.b16 %v804, %v803
    %v1007 = vpack.c.b16 %v806, %v805
    %v1008 = vpack.c.b16 %v808, %v807
    %v1009 = vpack.c.b16 %v810, %v809
    %v1010 = vpack.c.b16 %v812, %v811
    %v1011 = vpack.c.b16 %v814, %v813
    %v1012 = vpack.c.b16 %v816, %v815
    %v1013 = vpack.c.b16 %v818, %v817
    %v1014 = vpack.c.b16 %v820, %v819
    %v1015 = vpack.c.b16 %v822, %v821
    %v1016 = vpack.c.b16 %v824, %v823
    %v1017 = vpack.c.b16 %v826, %v825
    %v1018 = vpack.c.b16 %v828, %v827
    %v1019 = vpack.c.b16 %v830, %v829
    %v1020 = vpack.c.b16 %v832, %v831
    %v1021 = vpack.c.b16 %v834, %v833
    %v1022 = vpack.c.b16 %v836, %v835
    %v1023 = vpack.c.b16 %v838, %v837
    %v1024 = vpack.c.b16 %v840, %v839
    %v1025 = vpack.c.b16 %v842, %v841
    %v1026 = vpack.c.b16 %v844, %v843
    %v1027 = vpack.c.b16 %v846, %v845
    %v1028 = vpack.c.b16 %v848, %v847
    %v1029 = vpack.c.b16 %v850, %v849
    %v1030 = vpack.c.b16 %v852, %v851
    %v1031 = vpack.c.b16 %v854, %v853
    %v1032 = vpack.c.b16 %v856, %v855
    %v1033 = vpack.c.b16 %v858, %v857
    %v1034 = vpack.c.b16 %v860, %v859
    %v1035 = vpack.c.b16 %v862, %v861
    %v1036 = vpack.c.b16 %v864, %v863
    %v1037 = vpack.c.b16 %v866, %v865
    %v1038 = vpack.c.b16 %v868, %v867
    %v1039 = vpack.c.b16 %v870, %v869
    %v1040 = vpack.c.b16 %v872, %v871
    %v1041 = vpack.c.b16 %v874, %v873
    %v1042 = vpack.c.b16 %v876, %v875
    %v1043 = vpack.c.b16 %v878, %v877
    %v1044 = vpack.c.b16 %v880, %v879
    %v1045 = vpack.c.b16 %v882, %v881
    %v1046 = vpack.c.b16 %v884, %v883
    %v1047 = vpack.c.b16 %v886, %v885
    %v1048 = vpack.c.b16 %v888, %v887
    %v1049 = vpack.c.b16 %v890, %v889
    %v1050 = vpack.c.b16 %v892, %v891
    %v1051 = vpack.c.b16 %v894, %v893
    %v1052 = vpack.c.b16 %v896, %v895
    %v1053 = vpack.c.b16 %v898, %v897
    %v1054 = vpack.c.b16 %v900, %v899
    %v1055 = vpack.c.b16 %v902, %v901
    %v1056 = vpack.c.b16 %v904, %v903
    %v1057 = vpack.c.b16 %v906, %v905
    %v1058 = vpack.c.b16 %v908, %v907
    %v1059 = vpack.c.b16 %v910, %v909
    %v1060 = vpack.c.b16 %v912, %v911
    %v1061 = vpack.c.b16 %v914, %v913
    %v1062 = vpack.c.b16 %v916, %v915
    %v1063 = vpack.c.b16 %v918, %v917
    %v1064 = vpack.c.b16 %v920, %v919
    %v1065 = vpack.c.b16 %v922, %v921
    %v1066 = vpack.c.b16 %v924, %v923
    %v1067 = vpack.c.b16 %v926, %v925
    %v1068 = vpack.c.b16 %v928, %v927
    %v1069 = vpack.c.b16 %v930, %v929
    %v1070 = vpack.c.b16 %v932, %v931
    %v1071 = vpack.c.b16 %v934, %v933
    %v1072 = vpack.c.b16 %v936, %v935
    %v1073 = vpack.c.b16 %v938, %v937
    %v1074 = vpack.c.b16 %v940, %v939
    %v1075 = vpack.c.b16 %v942, %v941
    %v1076 = vpack.c.b16 %v944, %v943
    %v1077 = vpack.c.b16 %v946, %v945
    %v1078 = vpack.c.b16 %v948, %v947
    %v1079 = vpack.c.b16 %v950, %v949
    %v1080 = vpack.c.b16 %v952, %v951
    %1209 = vmatprep.subr.bf16.mxu0 0
    %1210 = vmatpush1.bf16.msra.mxu0 %v960
    %1211 = vmatprep.subr.bf16.mxu0 0
    %1212 = vmatpush1.bf16.msra.mxu0 %v959
    %1213 = vmatprep.subr.bf16.mxu0 0
    %1214 = vmatpush1.bf16.msra.mxu0 %v958
    %1215 = vmatprep.subr.bf16.mxu0 0
    %1216 = vmatpush1.bf16.msra.mxu0 %v957
    %1217 = vmatprep.subr.bf16.mxu0 0
    %1218 = vmatpush1.bf16.msra.mxu0 %v956
    %1219 = vmatprep.subr.bf16.mxu0 0
    %1220 = vmatpush1.bf16.msra.mxu0 %v955
    %1221 = vmatprep.subr.bf16.mxu0 0
    %1222 = vmatpush1.bf16.msra.mxu0 %v954
    %1223 = vmatprep.subr.bf16.mxu0 0
    %1224 = vmatpush1.bf16.msra.mxu0 %v953
    %1225 = vmatprep.subr.bf16.mxu0 0
    %1226 = vmatpush2.bf16.msra.mxu0 %v968
    %1227 = vmatprep.subr.bf16.mxu0 0
    %1228 = vmatpush2.bf16.msra.mxu0 %v967
    %1229 = vmatprep.subr.bf16.mxu0 0
    %1230 = vmatpush2.bf16.msra.mxu0 %v966
    %1231 = vmatprep.subr.bf16.mxu0 0
    %1232 = vmatpush2.bf16.msra.mxu0 %v965
    %1233 = vmatprep.subr.bf16.mxu0 0
    %1234 = vmatpush2.bf16.msra.mxu0 %v964
    %1235 = vmatprep.subr.bf16.mxu0 0
    %1236 = vmatpush2.bf16.msra.mxu0 %v963
    %1237 = vmatprep.subr.bf16.mxu0 0
    %1238 = vmatpush2.bf16.msra.mxu0 %v962
    %1239 = vmatprep.subr.bf16.mxu0 0
    %1240 = vmatpush2.bf16.msra.mxu0 %v961
    %1241 = vmatprep.mubr.bf16.mxu0 %v410
    %1242 = vmatmul.mubr.bf16.gmra.mxu0 %v409
    %v1243 = vpop.f32.mrf.mxu0
    %v1244 = vadd.f32 %v360, %v1243
    %v1245 = vpop.f32.mrf.mxu0
    %v1246 = vpop.f32.mrf.mxu0
    %v1247 = vadd.f32 %v360, %v1246
    %v1248 = vpop.f32.mrf.mxu0
    %1249 = vdwg.mxu0
    %1250 = vmatprep.subr.bf16.mxu0 0
    %1251 = vmatpush1.bf16.msra.mxu0 %v976
    %1252 = vmatprep.subr.bf16.mxu0 0
    %1253 = vmatpush1.bf16.msra.mxu0 %v975
    %1254 = vmatprep.subr.bf16.mxu0 0
    %1255 = vmatpush1.bf16.msra.mxu0 %v974
    %1256 = vmatprep.subr.bf16.mxu0 0
    %1257 = vmatpush1.bf16.msra.mxu0 %v973
    %1258 = vmatprep.subr.bf16.mxu0 0
    %1259 = vmatpush1.bf16.msra.mxu0 %v972
    %1260 = vmatprep.subr.bf16.mxu0 0
    %1261 = vmatpush1.bf16.msra.mxu0 %v971
    %1262 = vmatprep.subr.bf16.mxu0 0
    %1263 = vmatpush1.bf16.msra.mxu0 %v970
    %1264 = vmatprep.subr.bf16.mxu0 0
    %1265 = vmatpush1.bf16.msra.mxu0 %v969
    %1266 = vmatprep.subr.bf16.mxu0 0
    %1267 = vmatpush2.bf16.msra.mxu0 %v984
    %1268 = vmatprep.subr.bf16.mxu0 0
    %1269 = vmatpush2.bf16.msra.mxu0 %v983
    %1270 = vmatprep.subr.bf16.mxu0 0
    %1271 = vmatpush2.bf16.msra.mxu0 %v982
    %1272 = vmatprep.subr.bf16.mxu0 0
    %1273 = vmatpush2.bf16.msra.mxu0 %v981
    %1274 = vmatprep.subr.bf16.mxu0 0
    %1275 = vmatpush2.bf16.msra.mxu0 %v980
    %1276 = vmatprep.subr.bf16.mxu0 0
    %1277 = vmatpush2.bf16.msra.mxu0 %v979
    %1278 = vmatprep.subr.bf16.mxu0 0
    %1279 = vmatpush2.bf16.msra.mxu0 %v978
    %1280 = vmatprep.subr.bf16.mxu0 0
    %1281 = vmatpush2.bf16.msra.mxu0 %v977
    %1282 = vmatprep.mubr.bf16.mxu0 %v412
    %1283 = vmatmul.mubr.bf16.gmra.mxu0 %v411
    %v1284 = vpop.f32.mrf.mxu0
    %v1285 = vadd.f32 %v1244, %v1284
    %v1286 = vpop.f32.mrf.mxu0
    %v1287 = vpop.f32.mrf.mxu0
    %v1288 = vadd.f32 %v1247, %v1287
    %v1289 = vpop.f32.mrf.mxu0
    %1290 = vdwg.mxu0
    %1291 = vmatprep.subr.bf16.mxu0 0
    %1292 = vmatpush1.bf16.msra.mxu0 %v992
    %1293 = vmatprep.subr.bf16.mxu0 0
    %1294 = vmatpush1.bf16.msra.mxu0 %v991
    %1295 = vmatprep.subr.bf16.mxu0 0
    %1296 = vmatpush1.bf16.msra.mxu0 %v990
    %1297 = vmatprep.subr.bf16.mxu0 0
    %1298 = vmatpush1.bf16.msra.mxu0 %v989
    %1299 = vmatprep.subr.bf16.mxu0 0
    %1300 = vmatpush1.bf16.msra.mxu0 %v988
    %1301 = vmatprep.subr.bf16.mxu0 0
    %1302 = vmatpush1.bf16.msra.mxu0 %v987
    %1303 = vmatprep.subr.bf16.mxu0 0
    %1304 = vmatpush1.bf16.msra.mxu0 %v986
    %1305 = vmatprep.subr.bf16.mxu0 0
    %1306 = vmatpush1.bf16.msra.mxu0 %v985
    %1307 = vmatprep.subr.bf16.mxu0 0
    %1308 = vmatpush2.bf16.msra.mxu0 %v1000
    %1309 = vmatprep.subr.bf16.mxu0 0
    %1310 = vmatpush2.bf16.msra.mxu0 %v999
    %1311 = vmatprep.subr.bf16.mxu0 0
    %1312 = vmatpush2.bf16.msra.mxu0 %v998
    %1313 = vmatprep.subr.bf16.mxu0 0
    %1314 = vmatpush2.bf16.msra.mxu0 %v997
    %1315 = vmatprep.subr.bf16.mxu0 0
    %1316 = vmatpush2.bf16.msra.mxu0 %v996
    %1317 = vmatprep.subr.bf16.mxu0 0
    %1318 = vmatpush2.bf16.msra.mxu0 %v995
    %1319 = vmatprep.subr.bf16.mxu0 0
    %1320 = vmatpush2.bf16.msra.mxu0 %v994
    %1321 = vmatprep.subr.bf16.mxu0 0
    %1322 = vmatpush2.bf16.msra.mxu0 %v993
    %1323 = vmatprep.mubr.bf16.mxu0 %v414
    %1324 = vmatmul.mubr.bf16.gmra.mxu0 %v413
    %v1325 = vpop.f32.mrf.mxu0
    %v1326 = vadd.f32 %v1285, %v1325
    %v1327 = vpop.f32.mrf.mxu0
    %v1328 = vpop.f32.mrf.mxu0
    %v1329 = vadd.f32 %v1288, %v1328
    %v1330 = vpop.f32.mrf.mxu0
    %1331 = vdwg.mxu0
    %1332 = vmatprep.subr.bf16.mxu0 0
    %1333 = vmatpush1.bf16.msra.mxu0 %v1008
    %1334 = vmatprep.subr.bf16.mxu0 0
    %1335 = vmatpush1.bf16.msra.mxu0 %v1007
    %1336 = vmatprep.subr.bf16.mxu0 0
    %1337 = vmatpush1.bf16.msra.mxu0 %v1006
    %1338 = vmatprep.subr.bf16.mxu0 0
    %1339 = vmatpush1.bf16.msra.mxu0 %v1005
    %1340 = vmatprep.subr.bf16.mxu0 0
    %1341 = vmatpush1.bf16.msra.mxu0 %v1004
    %1342 = vmatprep.subr.bf16.mxu0 0
    %1343 = vmatpush1.bf16.msra.mxu0 %v1003
    %1344 = vmatprep.subr.bf16.mxu0 0
    %1345 = vmatpush1.bf16.msra.mxu0 %v1002
    %1346 = vmatprep.subr.bf16.mxu0 0
    %1347 = vmatpush1.bf16.msra.mxu0 %v1001
    %1348 = vmatprep.subr.bf16.mxu0 0
    %1349 = vmatpush2.bf16.msra.mxu0 %v1016
    %1350 = vmatprep.subr.bf16.mxu0 0
    %1351 = vmatpush2.bf16.msra.mxu0 %v1015
    %1352 = vmatprep.subr.bf16.mxu0 0
    %1353 = vmatpush2.bf16.msra.mxu0 %v1014
    %1354 = vmatprep.subr.bf16.mxu0 0
    %1355 = vmatpush2.bf16.msra.mxu0 %v1013
    %1356 = vmatprep.subr.bf16.mxu0 0
    %1357 = vmatpush2.bf16.msra.mxu0 %v1012
    %1358 = vmatprep.subr.bf16.mxu0 0
    %1359 = vmatpush2.bf16.msra.mxu0 %v1011
    %1360 = vmatprep.subr.bf16.mxu0 0
    %1361 = vmatpush2.bf16.msra.mxu0 %v1010
    %1362 = vmatprep.subr.bf16.mxu0 0
    %1363 = vmatpush2.bf16.msra.mxu0 %v1009
    %1364 = vmatprep.mubr.bf16.mxu0 %v416
    %1365 = vmatmul.mubr.bf16.gmra.mxu0 %v415
    %v1366 = vpop.f32.mrf.mxu0
    %v1367 = vadd.f32 %v1326, %v1366
    %v1368 = vpop.f32.mrf.mxu0
    %v1369 = vpop.f32.mrf.mxu0
    %v1370 = vadd.f32 %v1329, %v1369
    %v1371 = vpop.f32.mrf.mxu0
    %1372 = vdwg.mxu0
    %1373 = vmatprep.subr.bf16.mxu0 0
    %1374 = vmatpush1.bf16.msra.mxu0 %v1024
    %1375 = vmatprep.subr.bf16.mxu0 0
    %1376 = vmatpush1.bf16.msra.mxu0 %v1023
    %1377 = vmatprep.subr.bf16.mxu0 0
    %1378 = vmatpush1.bf16.msra.mxu0 %v1022
    %1379 = vmatprep.subr.bf16.mxu0 0
    %1380 = vmatpush1.bf16.msra.mxu0 %v1021
    %1381 = vmatprep.subr.bf16.mxu0 0
    %1382 = vmatpush1.bf16.msra.mxu0 %v1020
    %1383 = vmatprep.subr.bf16.mxu0 0
    %1384 = vmatpush1.bf16.msra.mxu0 %v1019
    %1385 = vmatprep.subr.bf16.mxu0 0
    %1386 = vmatpush1.bf16.msra.mxu0 %v1018
    %1387 = vmatprep.subr.bf16.mxu0 0
    %1388 = vmatpush1.bf16.msra.mxu0 %v1017
    %1389 = vmatprep.subr.bf16.mxu0 0
    %1390 = vmatpush2.bf16.msra.mxu0 %v1032
    %1391 = vmatprep.subr.bf16.mxu0 0
    %1392 = vmatpush2.bf16.msra.mxu0 %v1031
    %1393 = vmatprep.subr.bf16.mxu0 0
    %1394 = vmatpush2.bf16.msra.mxu0 %v1030
    %1395 = vmatprep.subr.bf16.mxu0 0
    %1396 = vmatpush2.bf16.msra.mxu0 %v1029
    %1397 = vmatprep.subr.bf16.mxu0 0
    %1398 = vmatpush2.bf16.msra.mxu0 %v1028
    %1399 = vmatprep.subr.bf16.mxu0 0
    %1400 = vmatpush2.bf16.msra.mxu0 %v1027
    %1401 = vmatprep.subr.bf16.mxu0 0
    %1402 = vmatpush2.bf16.msra.mxu0 %v1026
    %1403 = vmatprep.subr.bf16.mxu0 0
    %1404 = vmatpush2.bf16.msra.mxu0 %v1025
    %1405 = vmatprep.mubr.bf16.mxu0 %v418
    %1406 = vmatmul.mubr.bf16.gmra.mxu0 %v417
    %v1407 = vpop.f32.mrf.mxu0
    %v1408 = vadd.f32 %v1367, %v1407
    %v1409 = vpop.f32.mrf.mxu0
    %v1410 = vpop.f32.mrf.mxu0
    %v1411 = vadd.f32 %v1370, %v1410
    %v1412 = vpop.f32.mrf.mxu0
    %1413 = vdwg.mxu0
    %1414 = vmatprep.subr.bf16.mxu0 0
    %1415 = vmatpush1.bf16.msra.mxu0 %v1040
    %1416 = vmatprep.subr.bf16.mxu0 0
    %1417 = vmatpush1.bf16.msra.mxu0 %v1039
    %1418 = vmatprep.subr.bf16.mxu0 0
    %1419 = vmatpush1.bf16.msra.mxu0 %v1038
    %1420 = vmatprep.subr.bf16.mxu0 0
    %1421 = vmatpush1.bf16.msra.mxu0 %v1037
    %1422 = vmatprep.subr.bf16.mxu0 0
    %1423 = vmatpush1.bf16.msra.mxu0 %v1036
    %1424 = vmatprep.subr.bf16.mxu0 0
    %1425 = vmatpush1.bf16.msra.mxu0 %v1035
    %1426 = vmatprep.subr.bf16.mxu0 0
    %1427 = vmatpush1.bf16.msra.mxu0 %v1034
    %1428 = vmatprep.subr.bf16.mxu0 0
    %1429 = vmatpush1.bf16.msra.mxu0 %v1033
    %1430 = vmatprep.subr.bf16.mxu0 0
    %1431 = vmatpush2.bf16.msra.mxu0 %v1048
    %1432 = vmatprep.subr.bf16.mxu0 0
    %1433 = vmatpush2.bf16.msra.mxu0 %v1047
    %1434 = vmatprep.subr.bf16.mxu0 0
    %1435 = vmatpush2.bf16.msra.mxu0 %v1046
    %1436 = vmatprep.subr.bf16.mxu0 0
    %1437 = vmatpush2.bf16.msra.mxu0 %v1045
    %1438 = vmatprep.subr.bf16.mxu0 0
    %1439 = vmatpush2.bf16.msra.mxu0 %v1044
    %1440 = vmatprep.subr.bf16.mxu0 0
    %1441 = vmatpush2.bf16.msra.mxu0 %v1043
    %1442 = vmatprep.subr.bf16.mxu0 0
    %1443 = vmatpush2.bf16.msra.mxu0 %v1042
    %1444 = vmatprep.subr.bf16.mxu0 0
    %1445 = vmatpush2.bf16.msra.mxu0 %v1041
    %1446 = vmatprep.mubr.bf16.mxu0 %v420
    %1447 = vmatmul.mubr.bf16.gmra.mxu0 %v419
    %v1448 = vpop.f32.mrf.mxu0
    %v1449 = vadd.f32 %v1408, %v1448
    %v1450 = vpop.f32.mrf.mxu0
    %v1451 = vpop.f32.mrf.mxu0
    %v1452 = vadd.f32 %v1411, %v1451
    %v1453 = vpop.f32.mrf.mxu0
    %1454 = vdwg.mxu0
    %1455 = vmatprep.subr.bf16.mxu0 0
    %1456 = vmatpush1.bf16.msra.mxu0 %v1056
    %1457 = vmatprep.subr.bf16.mxu0 0
    %1458 = vmatpush1.bf16.msra.mxu0 %v1055
    %1459 = vmatprep.subr.bf16.mxu0 0
    %1460 = vmatpush1.bf16.msra.mxu0 %v1054
    %1461 = vmatprep.subr.bf16.mxu0 0
    %1462 = vmatpush1.bf16.msra.mxu0 %v1053
    %1463 = vmatprep.subr.bf16.mxu0 0
    %1464 = vmatpush1.bf16.msra.mxu0 %v1052
    %1465 = vmatprep.subr.bf16.mxu0 0
    %1466 = vmatpush1.bf16.msra.mxu0 %v1051
    %1467 = vmatprep.subr.bf16.mxu0 0
    %1468 = vmatpush1.bf16.msra.mxu0 %v1050
    %1469 = vmatprep.subr.bf16.mxu0 0
    %1470 = vmatpush1.bf16.msra.mxu0 %v1049
    %1471 = vmatprep.subr.bf16.mxu0 0
    %1472 = vmatpush2.bf16.msra.mxu0 %v1064
    %1473 = vmatprep.subr.bf16.mxu0 0
    %1474 = vmatpush2.bf16.msra.mxu0 %v1063
    %1475 = vmatprep.subr.bf16.mxu0 0
    %1476 = vmatpush2.bf16.msra.mxu0 %v1062
    %1477 = vmatprep.subr.bf16.mxu0 0
    %1478 = vmatpush2.bf16.msra.mxu0 %v1061
    %1479 = vmatprep.subr.bf16.mxu0 0
    %1480 = vmatpush2.bf16.msra.mxu0 %v1060
    %1481 = vmatprep.subr.bf16.mxu0 0
    %1482 = vmatpush2.bf16.msra.mxu0 %v1059
    %1483 = vmatprep.subr.bf16.mxu0 0
    %1484 = vmatpush2.bf16.msra.mxu0 %v1058
    %1485 = vmatprep.subr.bf16.mxu0 0
    %1486 = vmatpush2.bf16.msra.mxu0 %v1057
    %1487 = vmatprep.mubr.bf16.mxu0 %v422
    %1488 = vmatmul.mubr.bf16.gmra.mxu0 %v421
    %v1489 = vpop.f32.mrf.mxu0
    %v1490 = vadd.f32 %v1449, %v1489
    %v1491 = vpop.f32.mrf.mxu0
    %v1492 = vpop.f32.mrf.mxu0
    %v1493 = vadd.f32 %v1452, %v1492
    %v1494 = vpop.f32.mrf.mxu0
    %1495 = vdwg.mxu0
    %1496 = vmatprep.subr.bf16.mxu0 0
    %1497 = vmatpush1.bf16.msra.mxu0 %v1072
    %1498 = vmatprep.subr.bf16.mxu0 0
    %1499 = vmatpush1.bf16.msra.mxu0 %v1071
    %1500 = vmatprep.subr.bf16.mxu0 0
    %1501 = vmatpush1.bf16.msra.mxu0 %v1070
    %1502 = vmatprep.subr.bf16.mxu0 0
    %1503 = vmatpush1.bf16.msra.mxu0 %v1069
    %1504 = vmatprep.subr.bf16.mxu0 0
    %1505 = vmatpush1.bf16.msra.mxu0 %v1068
    %1506 = vmatprep.subr.bf16.mxu0 0
    %1507 = vmatpush1.bf16.msra.mxu0 %v1067
    %1508 = vmatprep.subr.bf16.mxu0 0
    %1509 = vmatpush1.bf16.msra.mxu0 %v1066
    %1510 = vmatprep.subr.bf16.mxu0 0
    %1511 = vmatpush1.bf16.msra.mxu0 %v1065
    %1512 = vmatprep.subr.bf16.mxu0 0
    %1513 = vmatpush2.bf16.msra.mxu0 %v1080
    %1514 = vmatprep.subr.bf16.mxu0 0
    %1515 = vmatpush2.bf16.msra.mxu0 %v1079
    %1516 = vmatprep.subr.bf16.mxu0 0
    %1517 = vmatpush2.bf16.msra.mxu0 %v1078
    %1518 = vmatprep.subr.bf16.mxu0 0
    %1519 = vmatpush2.bf16.msra.mxu0 %v1077
    %1520 = vmatprep.subr.bf16.mxu0 0
    %1521 = vmatpush2.bf16.msra.mxu0 %v1076
    %1522 = vmatprep.subr.bf16.mxu0 0
    %1523 = vmatpush2.bf16.msra.mxu0 %v1075
    %1524 = vmatprep.subr.bf16.mxu0 0
    %1525 = vmatpush2.bf16.msra.mxu0 %v1074
    %1526 = vmatprep.subr.bf16.mxu0 0
    %1527 = vmatpush2.bf16.msra.mxu0 %v1073
    %1528 = vmatprep.mubr.bf16.mxu0 %v424
    %1529 = vmatmul.mubr.bf16.gmra.mxu0 %v423
    %v1530 = vpop.f32.mrf.mxu0
    %v1531 = vadd.f32 %v1490, %v1530
    %v1532 = vpop.f32.mrf.mxu0
    %v1533 = vpop.f32.mrf.mxu0
    %v1534 = vadd.f32 %v1493, %v1533
    %v1535 = vpop.f32.mrf.mxu0
    %1536 = vdwg.mxu0
    %v1537 = vmax.f32 %v1531, 0.0
    %v1538 = vmax.f32 %v1534, 0.0
    %v1539 = vpack.c.bf16 %v1538, %v1537
    %v1540 = vld [vmem:[%s4] sm:$0xf]
    %v1541 = vld [vmem:[%s4 + $0x4] sm:$0xf]
    %v1542 = vld [vmem:[%s4 + $0x8] sm:$0xf]
    %v1543 = vld [vmem:[%s4 + $0xc] sm:$0xf]
    %v1544 = vld [vmem:[%s4 + $0x10] sm:$0xf]
    %v1545 = vld [vmem:[%s4 + $0x14] sm:$0xf]
    %v1546 = vld [vmem:[%s4 + $0x18] sm:$0xf]
    %v1547 = vld [vmem:[%s4 + $0x1c] sm:$0xf]
    %v1548 = vld [vmem:[%s4 + $0x20] sm:$0xf]
    %v1549 = vld [vmem:[%s4 + $0x24] sm:$0xf]
    %v1550 = vld [vmem:[%s4 + $0x28] sm:$0xf]
    %v1551 = vld [vmem:[%s4 + $0x2c] sm:$0xf]
    %v1552 = vld [vmem:[%s4 + $0x30] sm:$0xf]
    %v1553 = vld [vmem:[%s4 + $0x34] sm:$0xf]
    %v1554 = vld [vmem:[%s4 + $0x38] sm:$0xf]
    %v1555 = vld [vmem:[%s4 + $0x3c] sm:$0xf]
    %v1556 = vld [vmem:[%s7 + $0x1] sm:$0x1]
    %v1557 = vld [vmem:[#allocation5] sm:$0xf]
    %v1558 = vld [vmem:[#allocation5 + $0x4] sm:$0xf]
    %v1559 = vld [vmem:[#allocation5 + $0x8] sm:$0xf]
    %v1560 = vld [vmem:[#allocation5 + $0xc] sm:$0xf]
    %v1561 = vld [vmem:[#allocation5 + $0x10] sm:$0xf]
    %v1562 = vld [vmem:[#allocation5 + $0x14] sm:$0xf]
    %v1563 = vld [vmem:[#allocation5 + $0x18] sm:$0xf]
    %v1564 = vld [vmem:[#allocation5 + $0x1c] sm:$0xf]
    %v1565 = vld [vmem:[#allocation5 + $0x20] sm:$0xf]
    %v1566 = vld [vmem:[#allocation5 + $0x24] sm:$0xf]
    %v1567 = vld [vmem:[#allocation5 + $0x28] sm:$0xf]
    %v1568 = vld [vmem:[#allocation5 + $0x2c] sm:$0xf]
    %v1569 = vld [vmem:[#allocation5 + $0x30] sm:$0xf]
    %v1570 = vld [vmem:[#allocation5 + $0x34] sm:$0xf]
    %v1571 = vld [vmem:[#allocation5 + $0x38] sm:$0xf]
    %v1572 = vld [vmem:[#allocation5 + $0x3c] sm:$0xf]
    %v1573 = vld [vmem:[#allocation5 + $0x40] sm:$0xf]
    %v1574 = vld [vmem:[#allocation5 + $0x44] sm:$0xf]
    %v1575 = vld [vmem:[#allocation5 + $0x48] sm:$0xf]
    %v1576 = vld [vmem:[#allocation5 + $0x4c] sm:$0xf]
    %v1577 = vld [vmem:[#allocation5 + $0x50] sm:$0xf]
    %v1578 = vld [vmem:[#allocation5 + $0x54] sm:$0xf]
    %v1579 = vld [vmem:[#allocation5 + $0x58] sm:$0xf]
    %v1580 = vld [vmem:[#allocation5 + $0x5c] sm:$0xf]
    %v1581 = vld [vmem:[#allocation5 + $0x60] sm:$0xf]
    %v1582 = vld [vmem:[#allocation5 + $0x64] sm:$0xf]
    %v1583 = vld [vmem:[#allocation5 + $0x68] sm:$0xf]
    %v1584 = vld [vmem:[#allocation5 + $0x6c] sm:$0xf]
    %v1585 = vld [vmem:[#allocation5 + $0x70] sm:$0xf]
    %v1586 = vld [vmem:[#allocation5 + $0x74] sm:$0xf]
    %v1587 = vld [vmem:[#allocation5 + $0x78] sm:$0xf]
    %v1588 = vld [vmem:[#allocation5 + $0x7c] sm:$0xf]
    %v1589 = vld [vmem:[#allocation5 + $0x80] sm:$0xf]
    %v1590 = vld [vmem:[#allocation5 + $0x84] sm:$0xf]
    %v1591 = vld [vmem:[#allocation5 + $0x88] sm:$0xf]
    %v1592 = vld [vmem:[#allocation5 + $0x8c] sm:$0xf]
    %v1593 = vld [vmem:[#allocation5 + $0x90] sm:$0xf]
    %v1594 = vld [vmem:[#allocation5 + $0x94] sm:$0xf]
    %v1595 = vld [vmem:[#allocation5 + $0x98] sm:$0xf]
    %v1596 = vld [vmem:[#allocation5 + $0x9c] sm:$0xf]
    %v1597 = vld [vmem:[#allocation5 + $0xa0] sm:$0xf]
    %v1598 = vld [vmem:[#allocation5 + $0xa4] sm:$0xf]
    %v1599 = vld [vmem:[#allocation5 + $0xa8] sm:$0xf]
    %v1600 = vld [vmem:[#allocation5 + $0xac] sm:$0xf]
    %v1601 = vld [vmem:[#allocation5 + $0xb0] sm:$0xf]
    %v1602 = vld [vmem:[#allocation5 + $0xb4] sm:$0xf]
    %v1603 = vld [vmem:[#allocation5 + $0xb8] sm:$0xf]
    %v1604 = vld [vmem:[#allocation5 + $0xbc] sm:$0xf]
    %v1605 = vlaneseq
    %v1606 = vshrl.u32 %v1605, 7
    %v1607 = vsub.s32 0, %v1606
    %v1608 = vrot.slane %v1556, %v1607
    %v1613 = vunpack.c.l.b16 %v88
    %v1614 = vunpack.c.h.b16 %v88
    %v1615 = vunpack.c.l.b16 %v89
    %v1616 = vunpack.c.l.b16 %v90
    %v1617 = vunpack.c.h.b16 %v90
    %v1618 = vunpack.c.l.b16 %v91
    %v1619 = vpack.c.b16 %v1616, %v1613
    %v1620 = vpack.c.b16 %v1617, %v1614
    %v1621 = vpack.c.b16 %v1618, %v1615
    %v1673 = vunpack.c.l.b16 %v1557
    %v1674 = vunpack.c.l.b16 %v1558
    %v1675 = vunpack.c.l.b16 %v1559
    %v1676 = vunpack.c.l.b16 %v1560
    %v1677 = vunpack.c.l.b16 %v1561
    %v1678 = vunpack.c.l.b16 %v1562
    %v1679 = vunpack.c.l.b16 %v1563
    %v1680 = vunpack.c.l.b16 %v1564
    %v1681 = vunpack.c.l.b16 %v1565
    %v1682 = vunpack.c.l.b16 %v1566
    %v1683 = vunpack.c.l.b16 %v1567
    %v1684 = vunpack.c.l.b16 %v1568
    %v1685 = vunpack.c.l.b16 %v1569
    %v1686 = vunpack.c.l.b16 %v1570
    %v1687 = vunpack.c.l.b16 %v1571
    %v1688 = vunpack.c.l.b16 %v1572
    %v1689 = vunpack.c.l.b16 %v1573
    %v1690 = vunpack.c.l.b16 %v1574
    %v1691 = vunpack.c.l.b16 %v1575
    %v1692 = vunpack.c.l.b16 %v1576
    %v1693 = vunpack.c.l.b16 %v1577
    %v1694 = vunpack.c.l.b16 %v1578
    %v1695 = vunpack.c.l.b16 %v1579
    %v1696 = vunpack.c.l.b16 %v1580
    %v1697 = vunpack.c.l.b16 %v1581
    %v1698 = vunpack.c.l.b16 %v1582
    %v1699 = vunpack.c.l.b16 %v1583
    %v1700 = vunpack.c.l.b16 %v1584
    %v1701 = vunpack.c.l.b16 %v1585
    %v1702 = vunpack.c.l.b16 %v1586
    %v1703 = vunpack.c.l.b16 %v1587
    %v1704 = vunpack.c.l.b16 %v1588
    %v1705 = vunpack.c.l.b16 %v1589
    %v1706 = vunpack.c.l.b16 %v1590
    %v1707 = vunpack.c.l.b16 %v1591
    %v1708 = vunpack.c.l.b16 %v1592
    %v1709 = vunpack.c.l.b16 %v1593
    %v1710 = vunpack.c.l.b16 %v1594
    %v1711 = vunpack.c.l.b16 %v1595
    %v1712 = vunpack.c.l.b16 %v1596
    %v1713 = vunpack.c.l.b16 %v1597
    %v1714 = vunpack.c.l.b16 %v1598
    %v1715 = vunpack.c.l.b16 %v1599
    %v1716 = vunpack.c.l.b16 %v1600
    %v1717 = vunpack.c.l.b16 %v1601
    %v1718 = vunpack.c.l.b16 %v1602
    %v1719 = vunpack.c.l.b16 %v1603
    %v1720 = vunpack.c.l.b16 %v1604
    %v1721 = vpack.c.b16 %v1674, %v1673
    %v1722 = vpack.c.b16 %v1676, %v1675
    %v1723 = vpack.c.b16 %v1678, %v1677
    %v1724 = vpack.c.b16 %v1680, %v1679
    %v1725 = vpack.c.b16 %v1682, %v1681
    %v1726 = vpack.c.b16 %v1684, %v1683
    %v1727 = vpack.c.b16 %v1686, %v1685
    %v1728 = vpack.c.b16 %v1688, %v1687
    %v1729 = vpack.c.b16 %v1690, %v1689
    %v1730 = vpack.c.b16 %v1692, %v1691
    %v1731 = vpack.c.b16 %v1694, %v1693
    %v1732 = vpack.c.b16 %v1696, %v1695
    %v1733 = vpack.c.b16 %v1698, %v1697
    %v1734 = vpack.c.b16 %v1700, %v1699
    %v1735 = vpack.c.b16 %v1702, %v1701
    %v1736 = vpack.c.b16 %v1704, %v1703
    %v1737 = vpack.c.b16 %v1706, %v1705
    %v1738 = vpack.c.b16 %v1708, %v1707
    %v1739 = vpack.c.b16 %v1710, %v1709
    %v1740 = vpack.c.b16 %v1712, %v1711
    %v1741 = vpack.c.b16 %v1714, %v1713
    %v1742 = vpack.c.b16 %v1716, %v1715
    %v1743 = vpack.c.b16 %v1718, %v1717
    %v1744 = vpack.c.b16 %v1720, %v1719
    %1769 = vmatprep.subr.bf16.mxu0 0
    %1770 = vmatpush1.bf16.msra.mxu0 %v1728
    %1771 = vmatprep.subr.bf16.mxu0 0
    %1772 = vmatpush1.bf16.msra.mxu0 %v1727
    %1773 = vmatprep.subr.bf16.mxu0 0
    %1774 = vmatpush1.bf16.msra.mxu0 %v1726
    %1775 = vmatprep.subr.bf16.mxu0 0
    %1776 = vmatpush1.bf16.msra.mxu0 %v1725
    %1777 = vmatprep.subr.bf16.mxu0 0
    %1778 = vmatpush1.bf16.msra.mxu0 %v1724
    %1779 = vmatprep.subr.bf16.mxu0 0
    %1780 = vmatpush1.bf16.msra.mxu0 %v1723
    %1781 = vmatprep.subr.bf16.mxu0 0
    %1782 = vmatpush1.bf16.msra.mxu0 %v1722
    %1783 = vmatprep.subr.bf16.mxu0 0
    %1784 = vmatpush1.bf16.msra.mxu0 %v1721
    %1785 = vmatprep.subr.bf16.mxu0 0
    %1786 = vmatpush2.bf16.msra.mxu0 %v1736
    %1787 = vmatprep.subr.bf16.mxu0 0
    %1788 = vmatpush2.bf16.msra.mxu0 %v1735
    %1789 = vmatprep.subr.bf16.mxu0 0
    %1790 = vmatpush2.bf16.msra.mxu0 %v1734
    %1791 = vmatprep.subr.bf16.mxu0 0
    %1792 = vmatpush2.bf16.msra.mxu0 %v1733
    %1793 = vmatprep.subr.bf16.mxu0 0
    %1794 = vmatpush2.bf16.msra.mxu0 %v1732
    %1795 = vmatprep.subr.bf16.mxu0 0
    %1796 = vmatpush2.bf16.msra.mxu0 %v1731
    %1797 = vmatprep.subr.bf16.mxu0 0
    %1798 = vmatpush2.bf16.msra.mxu0 %v1730
    %1799 = vmatprep.subr.bf16.mxu0 0
    %1800 = vmatpush2.bf16.msra.mxu0 %v1729
    %1801 = vmatprep.mubr.bf16.mxu0 %v1620
    %1802 = vmatmul.mubr.bf16.gmra.mxu0 %v1619
    %v1803 = vpop.f32.mrf.mxu0
    %v1804 = vadd.f32 %v1608, %v1803
    %v1805 = vpop.f32.mrf.mxu0
    %v1806 = vpop.f32.mrf.mxu0
    %v1807 = vadd.f32 %v1608, %v1806
    %v1808 = vpop.f32.mrf.mxu0
    %1809 = vdwg.mxu0
    %1810 = vmatprep.subr.bf16.mxu0 0
    %1811 = vmatpush1.bf16.msra.mxu0 %v1744
    %1812 = vmatprep.subr.bf16.mxu0 0
    %1813 = vmatpush1.bf16.msra.mxu0 %v1743
    %1814 = vmatprep.subr.bf16.mxu0 0
    %1815 = vmatpush1.bf16.msra.mxu0 %v1742
    %1816 = vmatprep.subr.bf16.mxu0 0
    %1817 = vmatpush1.bf16.msra.mxu0 %v1741
    %1818 = vmatprep.subr.bf16.mxu0 0
    %1819 = vmatpush1.bf16.msra.mxu0 %v1740
    %1820 = vmatprep.subr.bf16.mxu0 0
    %1821 = vmatpush1.bf16.msra.mxu0 %v1739
    %1822 = vmatprep.subr.bf16.mxu0 0
    %1823 = vmatpush1.bf16.msra.mxu0 %v1738
    %1824 = vmatprep.subr.bf16.mxu0 0
    %1825 = vmatpush1.bf16.msra.mxu0 %v1737
    %1826 = vmatprep.subr.bf16.mxu0 0
    %1827 = vmatpush2.bf16.msra.mxu0 0
    %1828 = vmatprep.subr.bf16.mxu0 0
    %1829 = vmatpush2.bf16.msra.mxu0 0
    %1830 = vmatprep.subr.bf16.mxu0 0
    %1831 = vmatpush2.bf16.msra.mxu0 0
    %1832 = vmatprep.subr.bf16.mxu0 0
    %1833 = vmatpush2.bf16.msra.mxu0 0
    %1834 = vmatprep.subr.bf16.mxu0 0
    %1835 = vmatpush2.bf16.msra.mxu0 0
    %1836 = vmatprep.subr.bf16.mxu0 0
    %1837 = vmatpush2.bf16.msra.mxu0 0
    %1838 = vmatprep.subr.bf16.mxu0 0
    %1839 = vmatpush2.bf16.msra.mxu0 0
    %1840 = vmatprep.subr.bf16.mxu0 0
    %1841 = vmatpush2.bf16.msra.mxu0 0
    %1842 = vmatprep.mubr.bf16.mxu0 0
    %1843 = vmatmul.mubr.bf16.gmra.mxu0 %v1621
    %v1844 = vpop.f32.mrf.mxu0
    %v1845 = vadd.f32 %v1804, %v1844
    %v1846 = vpop.f32.mrf.mxu0
    %v1847 = vpop.f32.mrf.mxu0
    %v1848 = vadd.f32 %v1807, %v1847
    %v1849 = vpop.f32.mrf.mxu0
    %1850 = vdwg.mxu0
    %v1851 = vmax.f32 %v1845, 0.0
    %v1852 = vmax.f32 %v1848, 0.0
    %v1853 = vpack.c.bf16 %v1852, %v1851
    %v1854 = vld [vmem:[%s5] sm:$0xf]
    %v1855 = vld [vmem:[%s5 + $0x4] sm:$0xf]
    %v1856 = vld [vmem:[%s5 + $0x8] sm:$0xf]
    %v1857 = vld [vmem:[%s5 + $0xc] sm:$0xf]
    %v1858 = vld [vmem:[%s5 + $0x10] sm:$0xf]
    %v1859 = vld [vmem:[%s5 + $0x14] sm:$0xf]
    %v1860 = vld [vmem:[%s5 + $0x18] sm:$0xf]
    %v1861 = vld [vmem:[%s5 + $0x1c] sm:$0xf]
    %v1862 = vld [vmem:[%s5 + $0x20] sm:$0xf]
    %v1863 = vld [vmem:[%s5 + $0x24] sm:$0xf]
    %v1864 = vld [vmem:[%s5 + $0x28] sm:$0xf]
    %v1865 = vld [vmem:[%s5 + $0x2c] sm:$0xf]
    %v1866 = vld [vmem:[%s5 + $0x30] sm:$0xf]
    %v1867 = vld [vmem:[%s5 + $0x34] sm:$0xf]
    %v1868 = vld [vmem:[%s5 + $0x38] sm:$0xf]
    %v1869 = vld [vmem:[%s5 + $0x3c] sm:$0xf]
    %v1886 = vunpack.c.l.b16 %v1854
    %v1887 = vunpack.c.l.b16 %v1855
    %v1888 = vunpack.c.l.b16 %v1856
    %v1889 = vunpack.c.l.b16 %v1857
    %v1890 = vunpack.c.l.b16 %v1858
    %v1891 = vunpack.c.l.b16 %v1859
    %v1892 = vunpack.c.l.b16 %v1860
    %v1893 = vunpack.c.l.b16 %v1861
    %v1894 = vunpack.c.l.b16 %v1862
    %v1895 = vunpack.c.l.b16 %v1863
    %v1896 = vunpack.c.l.b16 %v1864
    %v1897 = vunpack.c.l.b16 %v1865
    %v1898 = vunpack.c.l.b16 %v1866
    %v1899 = vunpack.c.l.b16 %v1867
    %v1900 = vunpack.c.l.b16 %v1868
    %v1901 = vunpack.c.l.b16 %v1869
    %v1902 = vpack.c.b16 %v1887, %v1886
    %v1903 = vpack.c.b16 %v1889, %v1888
    %v1904 = vpack.c.b16 %v1891, %v1890
    %v1905 = vpack.c.b16 %v1893, %v1892
    %v1906 = vpack.c.b16 %v1895, %v1894
    %v1907 = vpack.c.b16 %v1897, %v1896
    %v1908 = vpack.c.b16 %v1899, %v1898
    %v1909 = vpack.c.b16 %v1901, %v1900
    %1918 = vmatprep.subr.bf16.mxu0 0
    %1919 = vmatpush1.bf16.msra.mxu0 %v1909
    %1920 = vmatprep.subr.bf16.mxu0 0
    %1921 = vmatpush1.bf16.msra.mxu0 %v1908
    %1922 = vmatprep.subr.bf16.mxu0 0
    %1923 = vmatpush1.bf16.msra.mxu0 %v1907
    %1924 = vmatprep.subr.bf16.mxu0 0
    %1925 = vmatpush1.bf16.msra.mxu0 %v1906
    %1926 = vmatprep.subr.bf16.mxu0 0
    %1927 = vmatpush1.bf16.msra.mxu0 %v1905
    %1928 = vmatprep.subr.bf16.mxu0 0
    %1929 = vmatpush1.bf16.msra.mxu0 %v1904
    %1930 = vmatprep.subr.bf16.mxu0 0
    %1931 = vmatpush1.bf16.msra.mxu0 %v1903
    %1932 = vmatprep.subr.bf16.mxu0 0
    %1933 = vmatpush1.bf16.msra.mxu0 %v1902
    %1934 = vmatprep.subr.bf16.mxu0 0
    %1935 = vmatpush2.bf16.msra.mxu0 0
    %1936 = vmatprep.subr.bf16.mxu0 0
    %1937 = vmatpush2.bf16.msra.mxu0 0
    %1938 = vmatprep.subr.bf16.mxu0 0
    %1939 = vmatpush2.bf16.msra.mxu0 0
    %1940 = vmatprep.subr.bf16.mxu0 0
    %1941 = vmatpush2.bf16.msra.mxu0 0
    %1942 = vmatprep.subr.bf16.mxu0 0
    %1943 = vmatpush2.bf16.msra.mxu0 0
    %1944 = vmatprep.subr.bf16.mxu0 0
    %1945 = vmatpush2.bf16.msra.mxu0 0
    %1946 = vmatprep.subr.bf16.mxu0 0
    %1947 = vmatpush2.bf16.msra.mxu0 0
    %1948 = vmatprep.subr.bf16.mxu0 0
    %1949 = vmatpush2.bf16.msra.mxu0 0
    %1950 = vmatprep.mubr.bf16.mxu0 0
    %1951 = vmatmul.mubr.bf16.gmra.mxu0 %v1853
    %v1952 = vpop.f32.mrf.mxu0
    %v1953 = vadd.f32 0.0, %v1952
    %v1954 = vpop.f32.mrf.mxu0
    %v1955 = vpop.f32.mrf.mxu0
    %v1956 = vadd.f32 0.0, %v1955
    %v1957 = vpop.f32.mrf.mxu0
    %1958 = vdwg.mxu0
    %v1975 = vunpack.c.l.b16 %v1540
    %v1976 = vunpack.c.l.b16 %v1541
    %v1977 = vunpack.c.l.b16 %v1542
    %v1978 = vunpack.c.l.b16 %v1543
    %v1979 = vunpack.c.l.b16 %v1544
    %v1980 = vunpack.c.l.b16 %v1545
    %v1981 = vunpack.c.l.b16 %v1546
    %v1982 = vunpack.c.l.b16 %v1547
    %v1983 = vunpack.c.l.b16 %v1548
    %v1984 = vunpack.c.l.b16 %v1549
    %v1985 = vunpack.c.l.b16 %v1550
    %v1986 = vunpack.c.l.b16 %v1551
    %v1987 = vunpack.c.l.b16 %v1552
    %v1988 = vunpack.c.l.b16 %v1553
    %v1989 = vunpack.c.l.b16 %v1554
    %v1990 = vunpack.c.l.b16 %v1555
    %v1991 = vpack.c.b16 %v1976, %v1975
    %v1992 = vpack.c.b16 %v1978, %v1977
    %v1993 = vpack.c.b16 %v1980, %v1979
    %v1994 = vpack.c.b16 %v1982, %v1981
    %v1995 = vpack.c.b16 %v1984, %v1983
    %v1996 = vpack.c.b16 %v1986, %v1985
    %v1997 = vpack.c.b16 %v1988, %v1987
    %v1998 = vpack.c.b16 %v1990, %v1989
    %2007 = vmatprep.subr.bf16.mxu0 0
    %2008 = vmatpush1.bf16.msra.mxu0 %v1998
    %2009 = vmatprep.subr.bf16.mxu0 0
    %2010 = vmatpush1.bf16.msra.mxu0 %v1997
    %2011 = vmatprep.subr.bf16.mxu0 0
    %2012 = vmatpush1.bf16.msra.mxu0 %v1996
    %2013 = vmatprep.subr.bf16.mxu0 0
    %2014 = vmatpush1.bf16.msra.mxu0 %v1995
    %2015 = vmatprep.subr.bf16.mxu0 0
    %2016 = vmatpush1.bf16.msra.mxu0 %v1994
    %2017 = vmatprep.subr.bf16.mxu0 0
    %2018 = vmatpush1.bf16.msra.mxu0 %v1993
    %2019 = vmatprep.subr.bf16.mxu0 0
    %2020 = vmatpush1.bf16.msra.mxu0 %v1992
    %2021 = vmatprep.subr.bf16.mxu0 0
    %2022 = vmatpush1.bf16.msra.mxu0 %v1991
    %2023 = vmatprep.subr.bf16.mxu0 0
    %2024 = vmatpush2.bf16.msra.mxu0 0
    %2025 = vmatprep.subr.bf16.mxu0 0
    %2026 = vmatpush2.bf16.msra.mxu0 0
    %2027 = vmatprep.subr.bf16.mxu0 0
    %2028 = vmatpush2.bf16.msra.mxu0 0
    %2029 = vmatprep.subr.bf16.mxu0 0
    %2030 = vmatpush2.bf16.msra.mxu0 0
    %2031 = vmatprep.subr.bf16.mxu0 0
    %2032 = vmatpush2.bf16.msra.mxu0 0
    %2033 = vmatprep.subr.bf16.mxu0 0
    %2034 = vmatpush2.bf16.msra.mxu0 0
    %2035 = vmatprep.subr.bf16.mxu0 0
    %2036 = vmatpush2.bf16.msra.mxu0 0
    %2037 = vmatprep.subr.bf16.mxu0 0
    %2038 = vmatpush2.bf16.msra.mxu0 0
    %2039 = vmatprep.mubr.bf16.mxu0 0
    %2040 = vmatmul.mubr.bf16.gmra.mxu0 %v1539
    %v2041 = vpop.f32.mrf.mxu0
    %v2042 = vadd.f32 %v1953, %v2041
    %v2043 = vpop.f32.mrf.mxu0
    %v2044 = vpop.f32.mrf.mxu0
    %v2045 = vadd.f32 %v1956, %v2044
    %v2046 = vpop.f32.mrf.mxu0
    %2047 = vdwg.mxu0
    %v2048 = vld [vmem:[%s7 + $0x2] sm:$0x1]
    %v2049 = vld [vmem:[#allocation7] sm:$0xf]
    %v2050 = vld [vmem:[#allocation7 + $0x4] sm:$0xf]
    %v2051 = vld [vmem:[#allocation7 + $0x8] sm:$0xf]
    %v2052 = vld [vmem:[#allocation7 + $0xc] sm:$0xf]
    %v2053 = vld [vmem:[#allocation7 + $0x10] sm:$0xf]
    %v2054 = vld [vmem:[#allocation7 + $0x14] sm:$0xf]
    %v2055 = vld [vmem:[#allocation7 + $0x18] sm:$0xf]
    %v2056 = vld [vmem:[#allocation7 + $0x1c] sm:$0xf]
    %v2057 = vld [vmem:[#allocation7 + $0x20] sm:$0xf]
    %v2058 = vld [vmem:[#allocation7 + $0x24] sm:$0xf]
    %v2059 = vld [vmem:[#allocation7 + $0x28] sm:$0xf]
    %v2060 = vld [vmem:[#allocation7 + $0x2c] sm:$0xf]
    %v2061 = vld [vmem:[#allocation7 + $0x30] sm:$0xf]
    %v2062 = vld [vmem:[#allocation7 + $0x34] sm:$0xf]
    %v2063 = vld [vmem:[#allocation7 + $0x38] sm:$0xf]
    %v2064 = vld [vmem:[#allocation7 + $0x3c] sm:$0xf]
    %v2065 = vld [vmem:[#allocation7 + $0x40] sm:$0xf]
    %v2066 = vld [vmem:[#allocation7 + $0x44] sm:$0xf]
    %v2067 = vld [vmem:[#allocation7 + $0x48] sm:$0xf]
    %v2068 = vld [vmem:[#allocation7 + $0x4c] sm:$0xf]
    %v2069 = vld [vmem:[#allocation7 + $0x50] sm:$0xf]
    %v2070 = vld [vmem:[#allocation7 + $0x54] sm:$0xf]
    %v2071 = vld [vmem:[#allocation7 + $0x58] sm:$0xf]
    %v2072 = vld [vmem:[#allocation7 + $0x5c] sm:$0xf]
    %v2073 = vld [vmem:[#allocation7 + $0x60] sm:$0xf]
    %v2074 = vld [vmem:[#allocation7 + $0x64] sm:$0xf]
    %v2075 = vld [vmem:[#allocation7 + $0x68] sm:$0xf]
    %v2076 = vld [vmem:[#allocation7 + $0x6c] sm:$0xf]
    %v2077 = vld [vmem:[#allocation7 + $0x70] sm:$0xf]
    %v2078 = vld [vmem:[#allocation7 + $0x74] sm:$0xf]
    %v2079 = vld [vmem:[#allocation7 + $0x78] sm:$0xf]
    %v2080 = vld [vmem:[#allocation7 + $0x7c] sm:$0xf]
    %v2081 = vld [vmem:[#allocation7 + $0x80] sm:$0xf]
    %v2082 = vld [vmem:[#allocation7 + $0x84] sm:$0xf]
    %v2083 = vld [vmem:[#allocation7 + $0x88] sm:$0xf]
    %v2084 = vld [vmem:[#allocation7 + $0x8c] sm:$0xf]
    %v2085 = vld [vmem:[#allocation7 + $0x90] sm:$0xf]
    %v2086 = vld [vmem:[#allocation7 + $0x94] sm:$0xf]
    %v2087 = vld [vmem:[#allocation7 + $0x98] sm:$0xf]
    %v2088 = vld [vmem:[#allocation7 + $0x9c] sm:$0xf]
    %v2089 = vld [vmem:[#allocation7 + $0xa0] sm:$0xf]
    %v2090 = vld [vmem:[#allocation7 + $0xa4] sm:$0xf]
    %v2091 = vld [vmem:[#allocation7 + $0xa8] sm:$0xf]
    %v2092 = vld [vmem:[#allocation7 + $0xac] sm:$0xf]
    %v2093 = vld [vmem:[#allocation7 + $0xb0] sm:$0xf]
    %v2094 = vld [vmem:[#allocation7 + $0xb4] sm:$0xf]
    %v2095 = vld [vmem:[#allocation7 + $0xb8] sm:$0xf]
    %v2096 = vld [vmem:[#allocation7 + $0xbc] sm:$0xf]
    %v2097 = vld [vmem:[#allocation7 + $0xc0] sm:$0xf]
    %v2098 = vld [vmem:[#allocation7 + $0xc4] sm:$0xf]
    %v2099 = vld [vmem:[#allocation7 + $0xc8] sm:$0xf]
    %v2100 = vld [vmem:[#allocation7 + $0xcc] sm:$0xf]
    %v2101 = vld [vmem:[#allocation7 + $0xd0] sm:$0xf]
    %v2102 = vld [vmem:[#allocation7 + $0xd4] sm:$0xf]
    %v2103 = vld [vmem:[#allocation7 + $0xd8] sm:$0xf]
    %v2104 = vld [vmem:[#allocation7 + $0xdc] sm:$0xf]
    %v2105 = vld [vmem:[#allocation7 + $0xe0] sm:$0xf]
    %v2106 = vld [vmem:[#allocation7 + $0xe4] sm:$0xf]
    %v2107 = vld [vmem:[#allocation7 + $0xe8] sm:$0xf]
    %v2108 = vld [vmem:[#allocation7 + $0xec] sm:$0xf]
    %v2109 = vld [vmem:[#allocation7 + $0xf0] sm:$0xf]
    %v2110 = vld [vmem:[#allocation7 + $0xf4] sm:$0xf]
    %v2111 = vld [vmem:[#allocation7 + $0xf8] sm:$0xf]
    %v2112 = vld [vmem:[#allocation7 + $0xfc] sm:$0xf]
    %v2113 = vld [vmem:[#allocation7 + $0x100] sm:$0xf]
    %v2114 = vld [vmem:[#allocation7 + $0x104] sm:$0xf]
    %v2115 = vld [vmem:[#allocation7 + $0x108] sm:$0xf]
    %v2116 = vld [vmem:[#allocation7 + $0x10c] sm:$0xf]
    %v2117 = vld [vmem:[#allocation7 + $0x110] sm:$0xf]
    %v2118 = vld [vmem:[#allocation7 + $0x114] sm:$0xf]
    %v2119 = vld [vmem:[#allocation7 + $0x118] sm:$0xf]
    %v2120 = vld [vmem:[#allocation7 + $0x11c] sm:$0xf]
    %v2121 = vld [vmem:[#allocation7 + $0x120] sm:$0xf]
    %v2122 = vld [vmem:[#allocation7 + $0x124] sm:$0xf]
    %v2123 = vld [vmem:[#allocation7 + $0x128] sm:$0xf]
    %v2124 = vld [vmem:[#allocation7 + $0x12c] sm:$0xf]
    %v2125 = vld [vmem:[#allocation7 + $0x130] sm:$0xf]
    %v2126 = vld [vmem:[#allocation7 + $0x134] sm:$0xf]
    %v2127 = vld [vmem:[#allocation7 + $0x138] sm:$0xf]
    %v2128 = vld [vmem:[#allocation7 + $0x13c] sm:$0xf]
    %v2129 = vld [vmem:[#allocation7 + $0x140] sm:$0xf]
    %v2130 = vld [vmem:[#allocation7 + $0x144] sm:$0xf]
    %v2131 = vld [vmem:[#allocation7 + $0x148] sm:$0xf]
    %v2132 = vld [vmem:[#allocation7 + $0x14c] sm:$0xf]
    %v2133 = vld [vmem:[#allocation7 + $0x150] sm:$0xf]
    %v2134 = vld [vmem:[#allocation7 + $0x154] sm:$0xf]
    %v2135 = vld [vmem:[#allocation7 + $0x158] sm:$0xf]
    %v2136 = vld [vmem:[#allocation7 + $0x15c] sm:$0xf]
    %v2137 = vld [vmem:[#allocation7 + $0x160] sm:$0xf]
    %v2138 = vld [vmem:[#allocation7 + $0x164] sm:$0xf]
    %v2139 = vld [vmem:[#allocation7 + $0x168] sm:$0xf]
    %v2140 = vld [vmem:[#allocation7 + $0x16c] sm:$0xf]
    %v2141 = vld [vmem:[#allocation7 + $0x170] sm:$0xf]
    %v2142 = vld [vmem:[#allocation7 + $0x174] sm:$0xf]
    %v2143 = vld [vmem:[#allocation7 + $0x178] sm:$0xf]
    %v2144 = vld [vmem:[#allocation7 + $0x17c] sm:$0xf]
    %v2145 = vld [vmem:[#allocation7 + $0x180] sm:$0xf]
    %v2146 = vld [vmem:[#allocation7 + $0x184] sm:$0xf]
    %v2147 = vld [vmem:[#allocation7 + $0x188] sm:$0xf]
    %v2148 = vld [vmem:[#allocation7 + $0x18c] sm:$0xf]
    %v2149 = vld [vmem:[#allocation7 + $0x190] sm:$0xf]
    %v2150 = vld [vmem:[#allocation7 + $0x194] sm:$0xf]
    %v2151 = vld [vmem:[#allocation7 + $0x198] sm:$0xf]
    %v2152 = vld [vmem:[#allocation7 + $0x19c] sm:$0xf]
    %v2153 = vld [vmem:[#allocation7 + $0x1a0] sm:$0xf]
    %v2154 = vld [vmem:[#allocation7 + $0x1a4] sm:$0xf]
    %v2155 = vld [vmem:[#allocation7 + $0x1a8] sm:$0xf]
    %v2156 = vld [vmem:[#allocation7 + $0x1ac] sm:$0xf]
    %v2157 = vld [vmem:[#allocation7 + $0x1b0] sm:$0xf]
    %v2158 = vld [vmem:[#allocation7 + $0x1b4] sm:$0xf]
    %v2159 = vld [vmem:[#allocation7 + $0x1b8] sm:$0xf]
    %v2160 = vld [vmem:[#allocation7 + $0x1bc] sm:$0xf]
    %v2161 = vld [vmem:[#allocation7 + $0x1c0] sm:$0xf]
    %v2162 = vld [vmem:[#allocation7 + $0x1c4] sm:$0xf]
    %v2163 = vld [vmem:[#allocation7 + $0x1c8] sm:$0xf]
    %v2164 = vld [vmem:[#allocation7 + $0x1cc] sm:$0xf]
    %v2165 = vld [vmem:[#allocation7 + $0x1d0] sm:$0xf]
    %v2166 = vld [vmem:[#allocation7 + $0x1d4] sm:$0xf]
    %v2167 = vld [vmem:[#allocation7 + $0x1d8] sm:$0xf]
    %v2168 = vld [vmem:[#allocation7 + $0x1dc] sm:$0xf]
    %v2169 = vld [vmem:[#allocation7 + $0x1e0] sm:$0xf]
    %v2170 = vld [vmem:[#allocation7 + $0x1e4] sm:$0xf]
    %v2171 = vld [vmem:[#allocation7 + $0x1e8] sm:$0xf]
    %v2172 = vld [vmem:[#allocation7 + $0x1ec] sm:$0xf]
    %v2173 = vld [vmem:[#allocation7 + $0x1f0] sm:$0xf]
    %v2174 = vld [vmem:[#allocation7 + $0x1f4] sm:$0xf]
    %v2175 = vld [vmem:[#allocation7 + $0x1f8] sm:$0xf]
    %v2176 = vld [vmem:[#allocation7 + $0x1fc] sm:$0xf]
    %v2177 = vlaneseq
    %v2178 = vshrl.u32 %v2177, 7
    %v2179 = vsub.s32 0, %v2178
    %v2180 = vrot.slane %v2048, %v2179
    %v2189 = vunpack.c.l.b16 %v92
    %v2190 = vunpack.c.h.b16 %v92
    %v2191 = vunpack.c.l.b16 %v93
    %v2192 = vunpack.c.h.b16 %v93
    %v2193 = vunpack.c.l.b16 %v94
    %v2194 = vunpack.c.h.b16 %v94
    %v2195 = vunpack.c.l.b16 %v95
    %v2196 = vunpack.c.h.b16 %v95
    %v2197 = vunpack.c.l.b16 %v96
    %v2198 = vunpack.c.h.b16 %v96
    %v2199 = vunpack.c.l.b16 %v97
    %v2200 = vunpack.c.h.b16 %v97
    %v2201 = vunpack.c.l.b16 %v98
    %v2202 = vunpack.c.h.b16 %v98
    %v2203 = vunpack.c.l.b16 %v99
    %v2204 = vunpack.c.h.b16 %v99
    %v2205 = vpack.c.b16 %v2197, %v2189
    %v2206 = vpack.c.b16 %v2198, %v2190
    %v2207 = vpack.c.b16 %v2199, %v2191
    %v2208 = vpack.c.b16 %v2200, %v2192
    %v2209 = vpack.c.b16 %v2201, %v2193
    %v2210 = vpack.c.b16 %v2202, %v2194
    %v2211 = vpack.c.b16 %v2203, %v2195
    %v2212 = vpack.c.b16 %v2204, %v2196
    %v2349 = vunpack.c.l.b16 %v2049
    %v2350 = vunpack.c.l.b16 %v2050
    %v2351 = vunpack.c.l.b16 %v2051
    %v2352 = vunpack.c.l.b16 %v2052
    %v2353 = vunpack.c.l.b16 %v2053
    %v2354 = vunpack.c.l.b16 %v2054
    %v2355 = vunpack.c.l.b16 %v2055
    %v2356 = vunpack.c.l.b16 %v2056
    %v2357 = vunpack.c.l.b16 %v2057
    %v2358 = vunpack.c.l.b16 %v2058
    %v2359 = vunpack.c.l.b16 %v2059
    %v2360 = vunpack.c.l.b16 %v2060
    %v2361 = vunpack.c.l.b16 %v2061
    %v2362 = vunpack.c.l.b16 %v2062
    %v2363 = vunpack.c.l.b16 %v2063
    %v2364 = vunpack.c.l.b16 %v2064
    %v2365 = vunpack.c.l.b16 %v2065
    %v2366 = vunpack.c.l.b16 %v2066
    %v2367 = vunpack.c.l.b16 %v2067
    %v2368 = vunpack.c.l.b16 %v2068
    %v2369 = vunpack.c.l.b16 %v2069
    %v2370 = vunpack.c.l.b16 %v2070
    %v2371 = vunpack.c.l.b16 %v2071
    %v2372 = vunpack.c.l.b16 %v2072
    %v2373 = vunpack.c.l.b16 %v2073
    %v2374 = vunpack.c.l.b16 %v2074
    %v2375 = vunpack.c.l.b16 %v2075
    %v2376 = vunpack.c.l.b16 %v2076
    %v2377 = vunpack.c.l.b16 %v2077
    %v2378 = vunpack.c.l.b16 %v2078
    %v2379 = vunpack.c.l.b16 %v2079
    %v2380 = vunpack.c.l.b16 %v2080
    %v2381 = vunpack.c.l.b16 %v2081
    %v2382 = vunpack.c.l.b16 %v2082
    %v2383 = vunpack.c.l.b16 %v2083
    %v2384 = vunpack.c.l.b16 %v2084
    %v2385 = vunpack.c.l.b16 %v2085
    %v2386 = vunpack.c.l.b16 %v2086
    %v2387 = vunpack.c.l.b16 %v2087
    %v2388 = vunpack.c.l.b16 %v2088
    %v2389 = vunpack.c.l.b16 %v2089
    %v2390 = vunpack.c.l.b16 %v2090
    %v2391 = vunpack.c.l.b16 %v2091
    %v2392 = vunpack.c.l.b16 %v2092
    %v2393 = vunpack.c.l.b16 %v2093
    %v2394 = vunpack.c.l.b16 %v2094
    %v2395 = vunpack.c.l.b16 %v2095
    %v2396 = vunpack.c.l.b16 %v2096
    %v2397 = vunpack.c.l.b16 %v2097
    %v2398 = vunpack.c.l.b16 %v2098
    %v2399 = vunpack.c.l.b16 %v2099
    %v2400 = vunpack.c.l.b16 %v2100
    %v2401 = vunpack.c.l.b16 %v2101
    %v2402 = vunpack.c.l.b16 %v2102
    %v2403 = vunpack.c.l.b16 %v2103
    %v2404 = vunpack.c.l.b16 %v2104
    %v2405 = vunpack.c.l.b16 %v2105
    %v2406 = vunpack.c.l.b16 %v2106
    %v2407 = vunpack.c.l.b16 %v2107
    %v2408 = vunpack.c.l.b16 %v2108
    %v2409 = vunpack.c.l.b16 %v2109
    %v2410 = vunpack.c.l.b16 %v2110
    %v2411 = vunpack.c.l.b16 %v2111
    %v2412 = vunpack.c.l.b16 %v2112
    %v2413 = vunpack.c.l.b16 %v2113
    %v2414 = vunpack.c.l.b16 %v2114
    %v2415 = vunpack.c.l.b16 %v2115
    %v2416 = vunpack.c.l.b16 %v2116
    %v2417 = vunpack.c.l.b16 %v2117
    %v2418 = vunpack.c.l.b16 %v2118
    %v2419 = vunpack.c.l.b16 %v2119
    %v2420 = vunpack.c.l.b16 %v2120
    %v2421 = vunpack.c.l.b16 %v2121
    %v2422 = vunpack.c.l.b16 %v2122
    %v2423 = vunpack.c.l.b16 %v2123
    %v2424 = vunpack.c.l.b16 %v2124
    %v2425 = vunpack.c.l.b16 %v2125
    %v2426 = vunpack.c.l.b16 %v2126
    %v2427 = vunpack.c.l.b16 %v2127
    %v2428 = vunpack.c.l.b16 %v2128
    %v2429 = vunpack.c.l.b16 %v2129
    %v2430 = vunpack.c.l.b16 %v2130
    %v2431 = vunpack.c.l.b16 %v2131
    %v2432 = vunpack.c.l.b16 %v2132
    %v2433 = vunpack.c.l.b16 %v2133
    %v2434 = vunpack.c.l.b16 %v2134
    %v2435 = vunpack.c.l.b16 %v2135
    %v2436 = vunpack.c.l.b16 %v2136
    %v2437 = vunpack.c.l.b16 %v2137
    %v2438 = vunpack.c.l.b16 %v2138
    %v2439 = vunpack.c.l.b16 %v2139
    %v2440 = vunpack.c.l.b16 %v2140
    %v2441 = vunpack.c.l.b16 %v2141
    %v2442 = vunpack.c.l.b16 %v2142
    %v2443 = vunpack.c.l.b16 %v2143
    %v2444 = vunpack.c.l.b16 %v2144
    %v2445 = vunpack.c.l.b16 %v2145
    %v2446 = vunpack.c.l.b16 %v2146
    %v2447 = vunpack.c.l.b16 %v2147
    %v2448 = vunpack.c.l.b16 %v2148
    %v2449 = vunpack.c.l.b16 %v2149
    %v2450 = vunpack.c.l.b16 %v2150
    %v2451 = vunpack.c.l.b16 %v2151
    %v2452 = vunpack.c.l.b16 %v2152
    %v2453 = vunpack.c.l.b16 %v2153
    %v2454 = vunpack.c.l.b16 %v2154
    %v2455 = vunpack.c.l.b16 %v2155
    %v2456 = vunpack.c.l.b16 %v2156
    %v2457 = vunpack.c.l.b16 %v2157
    %v2458 = vunpack.c.l.b16 %v2158
    %v2459 = vunpack.c.l.b16 %v2159
    %v2460 = vunpack.c.l.b16 %v2160
    %v2461 = vunpack.c.l.b16 %v2161
    %v2462 = vunpack.c.l.b16 %v2162
    %v2463 = vunpack.c.l.b16 %v2163
    %v2464 = vunpack.c.l.b16 %v2164
    %v2465 = vunpack.c.l.b16 %v2165
    %v2466 = vunpack.c.l.b16 %v2166
    %v2467 = vunpack.c.l.b16 %v2167
    %v2468 = vunpack.c.l.b16 %v2168
    %v2469 = vunpack.c.l.b16 %v2169
    %v2470 = vunpack.c.l.b16 %v2170
    %v2471 = vunpack.c.l.b16 %v2171
    %v2472 = vunpack.c.l.b16 %v2172
    %v2473 = vunpack.c.l.b16 %v2173
    %v2474 = vunpack.c.l.b16 %v2174
    %v2475 = vunpack.c.l.b16 %v2175
    %v2476 = vunpack.c.l.b16 %v2176
    %v2477 = vpack.c.b16 %v2350, %v2349
    %v2478 = vpack.c.b16 %v2352, %v2351
    %v2479 = vpack.c.b16 %v2354, %v2353
    %v2480 = vpack.c.b16 %v2356, %v2355
    %v2481 = vpack.c.b16 %v2358, %v2357
    %v2482 = vpack.c.b16 %v2360, %v2359
    %v2483 = vpack.c.b16 %v2362, %v2361
    %v2484 = vpack.c.b16 %v2364, %v2363
    %v2485 = vpack.c.b16 %v2366, %v2365
    %v2486 = vpack.c.b16 %v2368, %v2367
    %v2487 = vpack.c.b16 %v2370, %v2369
    %v2488 = vpack.c.b16 %v2372, %v2371
    %v2489 = vpack.c.b16 %v2374, %v2373
    %v2490 = vpack.c.b16 %v2376, %v2375
    %v2491 = vpack.c.b16 %v2378, %v2377
    %v2492 = vpack.c.b16 %v2380, %v2379
    %v2493 = vpack.c.b16 %v2382, %v2381
    %v2494 = vpack.c.b16 %v2384, %v2383
    %v2495 = vpack.c.b16 %v2386, %v2385
    %v2496 = vpack.c.b16 %v2388, %v2387
    %v2497 = vpack.c.b16 %v2390, %v2389
    %v2498 = vpack.c.b16 %v2392, %v2391
    %v2499 = vpack.c.b16 %v2394, %v2393
    %v2500 = vpack.c.b16 %v2396, %v2395
    %v2501 = vpack.c.b16 %v2398, %v2397
    %v2502 = vpack.c.b16 %v2400, %v2399
    %v2503 = vpack.c.b16 %v2402, %v2401
    %v2504 = vpack.c.b16 %v2404, %v2403
    %v2505 = vpack.c.b16 %v2406, %v2405
    %v2506 = vpack.c.b16 %v2408, %v2407
    %v2507 = vpack.c.b16 %v2410, %v2409
    %v2508 = vpack.c.b16 %v2412, %v2411
    %v2509 = vpack.c.b16 %v2414, %v2413
    %v2510 = vpack.c.b16 %v2416, %v2415
    %v2511 = vpack.c.b16 %v2418, %v2417
    %v2512 = vpack.c.b16 %v2420, %v2419
    %v2513 = vpack.c.b16 %v2422, %v2421
    %v2514 = vpack.c.b16 %v2424, %v2423
    %v2515 = vpack.c.b16 %v2426, %v2425
    %v2516 = vpack.c.b16 %v2428, %v2427
    %v2517 = vpack.c.b16 %v2430, %v2429
    %v2518 = vpack.c.b16 %v2432, %v2431
    %v2519 = vpack.c.b16 %v2434, %v2433
    %v2520 = vpack.c.b16 %v2436, %v2435
    %v2521 = vpack.c.b16 %v2438, %v2437
    %v2522 = vpack.c.b16 %v2440, %v2439
    %v2523 = vpack.c.b16 %v2442, %v2441
    %v2524 = vpack.c.b16 %v2444, %v2443
    %v2525 = vpack.c.b16 %v2446, %v2445
    %v2526 = vpack.c.b16 %v2448, %v2447
    %v2527 = vpack.c.b16 %v2450, %v2449
    %v2528 = vpack.c.b16 %v2452, %v2451
    %v2529 = vpack.c.b16 %v2454, %v2453
    %v2530 = vpack.c.b16 %v2456, %v2455
    %v2531 = vpack.c.b16 %v2458, %v2457
    %v2532 = vpack.c.b16 %v2460, %v2459
    %v2533 = vpack.c.b16 %v2462, %v2461
    %v2534 = vpack.c.b16 %v2464, %v2463
    %v2535 = vpack.c.b16 %v2466, %v2465
    %v2536 = vpack.c.b16 %v2468, %v2467
    %v2537 = vpack.c.b16 %v2470, %v2469
    %v2538 = vpack.c.b16 %v2472, %v2471
    %v2539 = vpack.c.b16 %v2474, %v2473
    %v2540 = vpack.c.b16 %v2476, %v2475
    %2605 = vmatprep.subr.bf16.mxu0 0
    %2606 = vmatpush1.bf16.msra.mxu0 %v2484
    %2607 = vmatprep.subr.bf16.mxu0 0
    %2608 = vmatpush1.bf16.msra.mxu0 %v2483
    %2609 = vmatprep.subr.bf16.mxu0 0
    %2610 = vmatpush1.bf16.msra.mxu0 %v2482
    %2611 = vmatprep.subr.bf16.mxu0 0
    %2612 = vmatpush1.bf16.msra.mxu0 %v2481
    %2613 = vmatprep.subr.bf16.mxu0 0
    %2614 = vmatpush1.bf16.msra.mxu0 %v2480
    %2615 = vmatprep.subr.bf16.mxu0 0
    %2616 = vmatpush1.bf16.msra.mxu0 %v2479
    %2617 = vmatprep.subr.bf16.mxu0 0
    %2618 = vmatpush1.bf16.msra.mxu0 %v2478
    %2619 = vmatprep.subr.bf16.mxu0 0
    %2620 = vmatpush1.bf16.msra.mxu0 %v2477
    %2621 = vmatprep.subr.bf16.mxu0 0
    %2622 = vmatpush2.bf16.msra.mxu0 %v2492
    %2623 = vmatprep.subr.bf16.mxu0 0
    %2624 = vmatpush2.bf16.msra.mxu0 %v2491
    %2625 = vmatprep.subr.bf16.mxu0 0
    %2626 = vmatpush2.bf16.msra.mxu0 %v2490
    %2627 = vmatprep.subr.bf16.mxu0 0
    %2628 = vmatpush2.bf16.msra.mxu0 %v2489
    %2629 = vmatprep.subr.bf16.mxu0 0
    %2630 = vmatpush2.bf16.msra.mxu0 %v2488
    %2631 = vmatprep.subr.bf16.mxu0 0
    %2632 = vmatpush2.bf16.msra.mxu0 %v2487
    %2633 = vmatprep.subr.bf16.mxu0 0
    %2634 = vmatpush2.bf16.msra.mxu0 %v2486
    %2635 = vmatprep.subr.bf16.mxu0 0
    %2636 = vmatpush2.bf16.msra.mxu0 %v2485
    %2637 = vmatprep.mubr.bf16.mxu0 %v2206
    %2638 = vmatmul.mubr.bf16.gmra.mxu0 %v2205
    %v2639 = vpop.f32.mrf.mxu0
    %v2640 = vadd.f32 %v2180, %v2639
    %v2641 = vpop.f32.mrf.mxu0
    %v2642 = vpop.f32.mrf.mxu0
    %v2643 = vadd.f32 %v2180, %v2642
    %v2644 = vpop.f32.mrf.mxu0
    %2645 = vdwg.mxu0
    %2646 = vmatprep.subr.bf16.mxu0 0
    %2647 = vmatpush1.bf16.msra.mxu0 %v2500
    %2648 = vmatprep.subr.bf16.mxu0 0
    %2649 = vmatpush1.bf16.msra.mxu0 %v2499
    %2650 = vmatprep.subr.bf16.mxu0 0
    %2651 = vmatpush1.bf16.msra.mxu0 %v2498
    %2652 = vmatprep.subr.bf16.mxu0 0
    %2653 = vmatpush1.bf16.msra.mxu0 %v2497
    %2654 = vmatprep.subr.bf16.mxu0 0
    %2655 = vmatpush1.bf16.msra.mxu0 %v2496
    %2656 = vmatprep.subr.bf16.mxu0 0
    %2657 = vmatpush1.bf16.msra.mxu0 %v2495
    %2658 = vmatprep.subr.bf16.mxu0 0
    %2659 = vmatpush1.bf16.msra.mxu0 %v2494
    %2660 = vmatprep.subr.bf16.mxu0 0
    %2661 = vmatpush1.bf16.msra.mxu0 %v2493
    %2662 = vmatprep.subr.bf16.mxu0 0
    %2663 = vmatpush2.bf16.msra.mxu0 %v2508
    %2664 = vmatprep.subr.bf16.mxu0 0
    %2665 = vmatpush2.bf16.msra.mxu0 %v2507
    %2666 = vmatprep.subr.bf16.mxu0 0
    %2667 = vmatpush2.bf16.msra.mxu0 %v2506
    %2668 = vmatprep.subr.bf16.mxu0 0
    %2669 = vmatpush2.bf16.msra.mxu0 %v2505
    %2670 = vmatprep.subr.bf16.mxu0 0
    %2671 = vmatpush2.bf16.msra.mxu0 %v2504
    %2672 = vmatprep.subr.bf16.mxu0 0
    %2673 = vmatpush2.bf16.msra.mxu0 %v2503
    %2674 = vmatprep.subr.bf16.mxu0 0
    %2675 = vmatpush2.bf16.msra.mxu0 %v2502
    %2676 = vmatprep.subr.bf16.mxu0 0
    %2677 = vmatpush2.bf16.msra.mxu0 %v2501
    %2678 = vmatprep.mubr.bf16.mxu0 %v2208
    %2679 = vmatmul.mubr.bf16.gmra.mxu0 %v2207
    %v2680 = vpop.f32.mrf.mxu0
    %v2681 = vadd.f32 %v2640, %v2680
    %v2682 = vpop.f32.mrf.mxu0
    %v2683 = vpop.f32.mrf.mxu0
    %v2684 = vadd.f32 %v2643, %v2683
    %v2685 = vpop.f32.mrf.mxu0
    %2686 = vdwg.mxu0
    %2687 = vmatprep.subr.bf16.mxu0 0
    %2688 = vmatpush1.bf16.msra.mxu0 %v2516
    %2689 = vmatprep.subr.bf16.mxu0 0
    %2690 = vmatpush1.bf16.msra.mxu0 %v2515
    %2691 = vmatprep.subr.bf16.mxu0 0
    %2692 = vmatpush1.bf16.msra.mxu0 %v2514
    %2693 = vmatprep.subr.bf16.mxu0 0
    %2694 = vmatpush1.bf16.msra.mxu0 %v2513
    %2695 = vmatprep.subr.bf16.mxu0 0
    %2696 = vmatpush1.bf16.msra.mxu0 %v2512
    %2697 = vmatprep.subr.bf16.mxu0 0
    %2698 = vmatpush1.bf16.msra.mxu0 %v2511
    %2699 = vmatprep.subr.bf16.mxu0 0
    %2700 = vmatpush1.bf16.msra.mxu0 %v2510
    %2701 = vmatprep.subr.bf16.mxu0 0
    %2702 = vmatpush1.bf16.msra.mxu0 %v2509
    %2703 = vmatprep.subr.bf16.mxu0 0
    %2704 = vmatpush2.bf16.msra.mxu0 %v2524
    %2705 = vmatprep.subr.bf16.mxu0 0
    %2706 = vmatpush2.bf16.msra.mxu0 %v2523
    %2707 = vmatprep.subr.bf16.mxu0 0
    %2708 = vmatpush2.bf16.msra.mxu0 %v2522
    %2709 = vmatprep.subr.bf16.mxu0 0
    %2710 = vmatpush2.bf16.msra.mxu0 %v2521
    %2711 = vmatprep.subr.bf16.mxu0 0
    %2712 = vmatpush2.bf16.msra.mxu0 %v2520
    %2713 = vmatprep.subr.bf16.mxu0 0
    %2714 = vmatpush2.bf16.msra.mxu0 %v2519
    %2715 = vmatprep.subr.bf16.mxu0 0
    %2716 = vmatpush2.bf16.msra.mxu0 %v2518
    %2717 = vmatprep.subr.bf16.mxu0 0
    %2718 = vmatpush2.bf16.msra.mxu0 %v2517
    %2719 = vmatprep.mubr.bf16.mxu0 %v2210
    %2720 = vmatmul.mubr.bf16.gmra.mxu0 %v2209
    %v2721 = vpop.f32.mrf.mxu0
    %v2722 = vadd.f32 %v2681, %v2721
    %v2723 = vpop.f32.mrf.mxu0
    %v2724 = vpop.f32.mrf.mxu0
    %v2725 = vadd.f32 %v2684, %v2724
    %v2726 = vpop.f32.mrf.mxu0
    %2727 = vdwg.mxu0
    %2728 = vmatprep.subr.bf16.mxu0 0
    %2729 = vmatpush1.bf16.msra.mxu0 %v2532
    %2730 = vmatprep.subr.bf16.mxu0 0
    %2731 = vmatpush1.bf16.msra.mxu0 %v2531
    %2732 = vmatprep.subr.bf16.mxu0 0
    %2733 = vmatpush1.bf16.msra.mxu0 %v2530
    %2734 = vmatprep.subr.bf16.mxu0 0
    %2735 = vmatpush1.bf16.msra.mxu0 %v2529
    %2736 = vmatprep.subr.bf16.mxu0 0
    %2737 = vmatpush1.bf16.msra.mxu0 %v2528
    %2738 = vmatprep.subr.bf16.mxu0 0
    %2739 = vmatpush1.bf16.msra.mxu0 %v2527
    %2740 = vmatprep.subr.bf16.mxu0 0
    %2741 = vmatpush1.bf16.msra.mxu0 %v2526
    %2742 = vmatprep.subr.bf16.mxu0 0
    %2743 = vmatpush1.bf16.msra.mxu0 %v2525
    %2744 = vmatprep.subr.bf16.mxu0 0
    %2745 = vmatpush2.bf16.msra.mxu0 %v2540
    %2746 = vmatprep.subr.bf16.mxu0 0
    %2747 = vmatpush2.bf16.msra.mxu0 %v2539
    %2748 = vmatprep.subr.bf16.mxu0 0
    %2749 = vmatpush2.bf16.msra.mxu0 %v2538
    %2750 = vmatprep.subr.bf16.mxu0 0
    %2751 = vmatpush2.bf16.msra.mxu0 %v2537
    %2752 = vmatprep.subr.bf16.mxu0 0
    %2753 = vmatpush2.bf16.msra.mxu0 %v2536
    %2754 = vmatprep.subr.bf16.mxu0 0
    %2755 = vmatpush2.bf16.msra.mxu0 %v2535
    %2756 = vmatprep.subr.bf16.mxu0 0
    %2757 = vmatpush2.bf16.msra.mxu0 %v2534
    %2758 = vmatprep.subr.bf16.mxu0 0
    %2759 = vmatpush2.bf16.msra.mxu0 %v2533
    %2760 = vmatprep.mubr.bf16.mxu0 %v2212
    %2761 = vmatmul.mubr.bf16.gmra.mxu0 %v2211
    %v2762 = vpop.f32.mrf.mxu0
    %v2763 = vadd.f32 %v2722, %v2762
    %v2764 = vpop.f32.mrf.mxu0
    %v2765 = vpop.f32.mrf.mxu0
    %v2766 = vadd.f32 %v2725, %v2765
    %v2767 = vpop.f32.mrf.mxu0
    %2768 = vdwg.mxu0
    %v2769 = vmax.f32 %v2763, 0.0
    %v2770 = vmax.f32 %v2766, 0.0
    %v2771 = vpack.c.bf16 %v2770, %v2769
    %v2772 = vld [vmem:[%s6] sm:$0xf]
    %v2773 = vld [vmem:[%s6 + $0x4] sm:$0xf]
    %v2774 = vld [vmem:[%s6 + $0x8] sm:$0xf]
    %v2775 = vld [vmem:[%s6 + $0xc] sm:$0xf]
    %v2776 = vld [vmem:[%s6 + $0x10] sm:$0xf]
    %v2777 = vld [vmem:[%s6 + $0x14] sm:$0xf]
    %v2778 = vld [vmem:[%s6 + $0x18] sm:$0xf]
    %v2779 = vld [vmem:[%s6 + $0x1c] sm:$0xf]
    %v2780 = vld [vmem:[%s6 + $0x20] sm:$0xf]
    %v2781 = vld [vmem:[%s6 + $0x24] sm:$0xf]
    %v2782 = vld [vmem:[%s6 + $0x28] sm:$0xf]
    %v2783 = vld [vmem:[%s6 + $0x2c] sm:$0xf]
    %v2784 = vld [vmem:[%s6 + $0x30] sm:$0xf]
    %v2785 = vld [vmem:[%s6 + $0x34] sm:$0xf]
    %v2786 = vld [vmem:[%s6 + $0x38] sm:$0xf]
    %v2787 = vld [vmem:[%s6 + $0x3c] sm:$0xf]
    %v2804 = vunpack.c.l.b16 %v2772
    %v2805 = vunpack.c.l.b16 %v2773
    %v2806 = vunpack.c.l.b16 %v2774
    %v2807 = vunpack.c.l.b16 %v2775
    %v2808 = vunpack.c.l.b16 %v2776
    %v2809 = vunpack.c.l.b16 %v2777
    %v2810 = vunpack.c.l.b16 %v2778
    %v2811 = vunpack.c.l.b16 %v2779
    %v2812 = vunpack.c.l.b16 %v2780
    %v2813 = vunpack.c.l.b16 %v2781
    %v2814 = vunpack.c.l.b16 %v2782
    %v2815 = vunpack.c.l.b16 %v2783
    %v2816 = vunpack.c.l.b16 %v2784
    %v2817 = vunpack.c.l.b16 %v2785
    %v2818 = vunpack.c.l.b16 %v2786
    %v2819 = vunpack.c.l.b16 %v2787
    %v2820 = vpack.c.b16 %v2805, %v2804
    %v2821 = vpack.c.b16 %v2807, %v2806
    %v2822 = vpack.c.b16 %v2809, %v2808
    %v2823 = vpack.c.b16 %v2811, %v2810
    %v2824 = vpack.c.b16 %v2813, %v2812
    %v2825 = vpack.c.b16 %v2815, %v2814
    %v2826 = vpack.c.b16 %v2817, %v2816
    %v2827 = vpack.c.b16 %v2819, %v2818
    %2836 = vmatprep.subr.bf16.mxu0 0
    %2837 = vmatpush1.bf16.msra.mxu0 %v2827
    %2838 = vmatprep.subr.bf16.mxu0 0
    %2839 = vmatpush1.bf16.msra.mxu0 %v2826
    %2840 = vmatprep.subr.bf16.mxu0 0
    %2841 = vmatpush1.bf16.msra.mxu0 %v2825
    %2842 = vmatprep.subr.bf16.mxu0 0
    %2843 = vmatpush1.bf16.msra.mxu0 %v2824
    %2844 = vmatprep.subr.bf16.mxu0 0
    %2845 = vmatpush1.bf16.msra.mxu0 %v2823
    %2846 = vmatprep.subr.bf16.mxu0 0
    %2847 = vmatpush1.bf16.msra.mxu0 %v2822
    %2848 = vmatprep.subr.bf16.mxu0 0
    %2849 = vmatpush1.bf16.msra.mxu0 %v2821
    %2850 = vmatprep.subr.bf16.mxu0 0
    %2851 = vmatpush1.bf16.msra.mxu0 %v2820
    %2852 = vmatprep.subr.bf16.mxu0 0
    %2853 = vmatpush2.bf16.msra.mxu0 0
    %2854 = vmatprep.subr.bf16.mxu0 0
    %2855 = vmatpush2.bf16.msra.mxu0 0
    %2856 = vmatprep.subr.bf16.mxu0 0
    %2857 = vmatpush2.bf16.msra.mxu0 0
    %2858 = vmatprep.subr.bf16.mxu0 0
    %2859 = vmatpush2.bf16.msra.mxu0 0
    %2860 = vmatprep.subr.bf16.mxu0 0
    %2861 = vmatpush2.bf16.msra.mxu0 0
    %2862 = vmatprep.subr.bf16.mxu0 0
    %2863 = vmatpush2.bf16.msra.mxu0 0
    %2864 = vmatprep.subr.bf16.mxu0 0
    %2865 = vmatpush2.bf16.msra.mxu0 0
    %2866 = vmatprep.subr.bf16.mxu0 0
    %2867 = vmatpush2.bf16.msra.mxu0 0
    %2868 = vmatprep.mubr.bf16.mxu0 0
    %2869 = vmatmul.mubr.bf16.gmra.mxu0 %v2771
    %v2870 = vpop.f32.mrf.mxu0
    %v2871 = vadd.f32 0.0, %v2870
    %v2872 = vpop.f32.mrf.mxu0
    %v2873 = vpop.f32.mrf.mxu0
    %v2874 = vadd.f32 0.0, %v2873
    %v2875 = vpop.f32.mrf.mxu0
    %2876 = vdwg.mxu0
    %v2877 = vadd.f32 %v2042, %v2871
    %v2878 = vadd.f32 %v2045, %v2874
    %v2879 = vld [vmem:[%s7 + $0x3] sm:$0x1]
    %v2880 = vlaneseq
    %v2881 = vshrl.u32 %v2880, 7
    %v2882 = vsub.s32 0, %v2881
    %v2883 = vrot.slane %v2879, %v2882
    %v2884 = vadd.f32 %v2877, %v2883
    %v2885 = vadd.f32 %v2878, %v2883
    %v2886 = vld [vmem:[%s7 + $0x4] sm:$0x1]
    %v2887 = vlaneseq
    %v2888 = vshrl.u32 %v2887, 7
    %v2889 = vsub.s32 0, %v2888
    %v2890 = vrot.slane %v2886, %v2889
    %v2891 = vmul.f32 %v2884, %v2890
    %v2892 = vmul.f32 %v2885, %v2890
    %vm2893 = vcmask 523264
    %v2894 = vsel %vm2893, %v2891, 0.0
    %2895 = vadd.xlane.f32.xlu0 %v2894
    %v2896 = vpop.xlane.xlu0 %2895
    %v2897 = vsel %vm2893, %v2892, 0.0
    %2898 = vadd.xlane.f32.xlu0 %v2897
    %v2899 = vpop.xlane.xlu0 %2898
    %v2900 = vadd.f32 %v2896, %v2890
    %v2901 = vadd.f32 %v2899, %v2890
    %v2902 = vxor.u32 %v2900, 2147483648
    %v2903 = vxor.u32 %v2901, 2147483648
    %v2904 = vmul.f32 %v2902, 1.442695
    %v2905 = vpow.pop %v2904
    %v2906 = vmul.f32 %v2903, 1.442695
    %v2907 = vpow.pop %v2906
    %v2908 = vadd.f32 %v2905, 1.0
    %v2909 = vadd.f32 %v2907, 1.0
    %v2910 = vrcp.pop %v2908
    %v2911 = vmul.f32 1.0, %v2910
    %v2912 = vrcp.pop %v2909
    %v2913 = vmul.f32 1.0, %v2912
    %2914 = vst.msk [vmem:[#allocation8] sm:$0xff] %vm2893, %v2884
    %2915 = vst.msk [vmem:[#allocation8 + $0x8] sm:$0xff] %vm2893, %v2885
    %2917 = vset.pattern.permute.xlu0 64
    %2918 = vperm.xlu0 %2917, %v2900
    %v2919 = vpop.permute.xlu0 %2918
    %2922 = vset.pattern.permute.xlu0 64
    %2923 = vperm.xlu0 %2922, %v2901
    %v2924 = vpop.permute.xlu0 %2923
    %vm2926 = vcmask 785920
    %2927 = vst.msk [vmem:[#allocation8] sm:$0xff] %vm2926, %v2919
    %2928 = vst.msk [vmem:[#allocation8 + $0x8] sm:$0xff] %vm2926, %v2924
    %2930 = vset.pattern.permute.xlu0 64
    %2931 = vperm.xlu0 %2930, %v2911
    %v2932 = vpop.permute.xlu0 %2931
    %2935 = vset.pattern.permute.xlu0 64
    %2936 = vperm.xlu0 %2935, %v2913
    %v2937 = vpop.permute.xlu0 %2936
    %vm2939 = vcmask 1048320
    %2940 = vst.msk [vmem:[#allocation8] sm:$0xff] %vm2939, %v2932
    %2941 = vst.msk [vmem:[#allocation8 + $0x8] sm:$0xff] %vm2939, %v2937
    // Predicated region
    $region46: #{tpu_custom_call.1} parent=1 // pred_check
      _
    $region47: #{tpu_custom_call.1} parent=1 // pred_check_branch
      %2943 = sbr.rel (0) target = $region49
    $region48: #{tpu_custom_call.1} parent=1 // pred_region
      %s2945 = ssub.s32 256, 256
      %2946 = vsyncadd [#allocation4], %s2945
      %s2947 = sshll.u32 [#allocation8], 4
      %s2948 = int_to_ptr.vmem [resolvable:$true] %s2947
      %2953 = dma.vmem_to_hbm [thread:$0]  %s2948, 256, %s8, [#allocation4], 128, 128, 8
    $region49: #{tpu_custom_call.1} parent=1 // pred_fallthru
      _
    // Predicated region
    $region50: #{tpu_custom_call.1} parent=1 // pred_check
      _
    $region51: #{tpu_custom_call.1} parent=1 // pred_check_branch
      %2955 = sbr.rel (0) target = $region53
    $region52: #{tpu_custom_call.1} parent=1 // pred_region
      %2956 = dma.done [#allocation4], 256
    $region53: #{tpu_custom_call.1} parent=1 // pred_fallthru
      _
    %2957 = vsyncpa [#allocation3], 1
    %2958 = vsyncpa [#allocation6], 1
    %2959 = vsyncpa [#allocation4], 1

</llo_original>
